<compile_context>
chip_gen: v7x
topology: tpu7x:2x2x1
jax: 0.10.0
libtpu: 0.0.40
codegen_flags: <defaults>
</compile_context>

<pallas_src>
import jax
import jax.numpy as jnp
from jax.experimental import pallas as pl
from jax.experimental.pallas import tpu as pltpu


def hetero_graph_kernel(center_ref, ctx_ref,
                        w_ctx_ref, w_cen_ref, wa_blk_ref, e_exp_ref, w_edge_ref,
                        be_t_ref, bc_t_ref, bc_ref,
                        center_out_ref, context_out_ref):
    nde = be_t_ref.shape[1]          # N * edge_dim         (lane-packed h width)
    ndo = bc_t_ref.shape[1]          # N * out_context_dim  (lane-packed out width)
    mxu_dt = w_ctx_ref.dtype         # bf16 (or f32) MXU operand dtype

    ctx = ctx_ref[...]               # (GB, N*Dx)  f32, lane-dense
    cen = center_ref[...]            # (GB, Dc)    f32

    # Fused per-node projections:
    #   r1 = [ctx[n]@we_x | ctx[n]@wc_x] per node (block-diagonal weights)
    #   r2 = [cen@we_c tiled over nodes | cen@wc_x]
    r1 = jnp.dot(ctx.astype(mxu_dt), w_ctx_ref[...],
                 preferred_element_type=jnp.float32)           # (GB, N*De + N*Do)
    r2 = jnp.dot(cen.astype(mxu_dt), w_cen_ref[...],
                 preferred_element_type=jnp.float32)           # (GB, N*De + Do)

    # NodeAttention edge features: h[n] = relu(ctx[n]@we_x + cen@we_c + be).
    h = jnp.maximum(r1[:, :nde] + r2[:, :nde] + be_t_ref[...], 0.0)   # (GB, N*De)

    # Per-node attention scores via block-diag w_a, softmax over the N lanes.
    # (b_a omitted: softmax is shift-invariant, adding a scalar is a no-op.)
    scores = jnp.dot(h.astype(mxu_dt), wa_blk_ref[...],
                     preferred_element_type=jnp.float32)       # (GB, N)
    smax = jnp.max(scores, axis=-1, keepdims=True)
    e = jnp.exp(scores - smax)
    alpha = e * pl.reciprocal(jnp.sum(e, axis=-1, keepdims=True), approx=True)

    # Broadcast alpha[n] across its De lanes with a tiny 0/1 matmul (keeps the
    # packed lane layout; avoids any lane<->sublane reshape / repeat).
    alpha_exp = jnp.dot(alpha.astype(mxu_dt), e_exp_ref[...],
                        preferred_element_type=jnp.float32)    # (GB, N*De)
    edges = alpha_exp * h                                      # (GB, N*De)

    # r3 = [edges[n]@wc_e per node | mean_n(edges)@wc_e]  (the 1/N mean is folded
    # into the tiled weight -- exact by linearity of the matmul).
    r3 = jnp.dot(edges.astype(mxu_dt), w_edge_ref[...],
                 preferred_element_type=jnp.float32)           # (GB, N*Do + Do)

    # context' = relu(ctx@wc_x + edges@wc_e + bc) + ctx   (residual, lane-dense)
    context_out_ref[...] = (
        jnp.maximum(r1[:, nde:] + r3[:, :ndo] + bc_t_ref[...], 0.0) + ctx)
    # center'  = relu(cen@wc_x + mean(edges)@wc_e + bc)   (no residual; reuses
    #            the *context* updator exactly as the torch forward does)
    center_out_ref[...] = jnp.maximum(r2[:, nde:] + r3[:, ndo:] + bc_ref[...], 0.0)


def _pick_graphs_per_block(G):
    """Large tiles; 2 parallel grid steps when possible (feeds both v7x TCs)."""
    if G >= 16 and G % 16 == 0:
        gb = G // 2
    else:
        gb = G
    gb = min(gb, 1024)                       # keep double-buffered tiles small
    if G % gb != 0 or (gb % 8 != 0 and gb != G):
        gb = G
    return gb


def hetero_graph_batched(center, context, we_c, we_x, be, wa, ba,
                         wc_x, wc_e, bc, *,
                         graphs_per_block=None, mxu_dtype=jnp.bfloat16):
    """center: (G, Dc), context: (G, N, Dx) -> ((G, Do), (G, N, Do)).

    Weights use the torch module's natural shapes:
      we_x: (Dx, De)  we_c: (Dc, De)  be: (De,)  wa: (De,)  ba: unused
      wc_x: (Dx, Do)  wc_e: (De, Do)  bc: (Do,)
    """
    G, N, Dx = context.shape
    Dc = center.shape[1]
    De = we_x.shape[1]
    Do = wc_x.shape[1]
    if Dc != Dx or Do != Dx:
        raise ValueError("HeteroGraph.forward requires Dc == Dx == Do")
    del ba  # softmax shift-invariance: the attention score bias is a no-op

    GB = _pick_graphs_per_block(G) if graphs_per_block is None else graphs_per_block
    if G % GB != 0:
        raise ValueError("G must be divisible by graphs_per_block")
    if GB % 8 != 0 and GB != G:
        raise ValueError("graphs_per_block must be a multiple of 8 or equal G")

    f32 = jnp.float32
    eye_n = jnp.eye(N, dtype=f32)
    blk = lambda w: jnp.kron(eye_n, w.astype(f32))   # per-node block-diagonal map

    # Host-built, fused, lane-packed weights (VMEM-resident across the grid).
    w_ctx_fused = jnp.concatenate([blk(we_x), blk(wc_x)], axis=1).astype(mxu_dtype)
    w_cen_fused = jnp.concatenate([jnp.tile(we_c.astype(f32), (1, N)),
                                   wc_x.astype(f32)], axis=1).astype(mxu_dtype)
    wa_blk = blk(wa.reshape(De, 1)).astype(mxu_dtype)                  # (N*De, N)
    e_exp = blk(jnp.ones((1, De), f32)).astype(mxu_dtype)              # (N, N*De)
    w_edge_fused = jnp.concatenate(
        [blk(wc_e), jnp.tile(wc_e.astype(f32), (N, 1)) / N], axis=1).astype(mxu_dtype)
    be_t = jnp.tile(be.reshape(1, De).astype(f32), (1, N))             # (1, N*De)
    bc_t = jnp.tile(bc.reshape(1, Do).astype(f32), (1, N))             # (1, N*Do)
    bc_r = bc.reshape(1, Do).astype(f32)                               # (1, Do)

    ctx_packed = context.reshape(G, N * Dx).astype(f32)    # lane-dense input slab
    center = center.astype(f32)

    weights = (w_ctx_fused, w_cen_fused, wa_blk, e_exp, w_edge_fused,
               be_t, bc_t, bc_r)
    wspec = lambda a: pl.BlockSpec(a.shape, lambda g: (0,) * a.ndim)

    mxu_flops = 2 * G * sum(int(w.shape[0]) * int(w.shape[1]) for w in
                            (w_ctx_fused, w_cen_fused, wa_blk, e_exp, w_edge_fused))
    flops = mxu_flops + 12 * G * N * De
    transcendentals = G * (N + 1)
    bytes_accessed = int(sum(int(w.size) * w.dtype.itemsize for w in weights)
                         + ctx_packed.size * 4 + center.size * 4
                         + G * (N * Do + Do) * 4)

    center_out, context_out = pl.pallas_call(
        hetero_graph_kernel,
        out_shape=(jax.ShapeDtypeStruct((G, Do), f32),
                   jax.ShapeDtypeStruct((G, N * Do), f32)),   # lane-dense slab
        grid=(G // GB,),
        in_specs=[
            pl.BlockSpec((GB, Dc), lambda g: (g, 0)),         # center  (pipelined)
            pl.BlockSpec((GB, N * Dx), lambda g: (g, 0)),     # context (pipelined)
            *[wspec(w) for w in weights],                     # shared weights
        ],
        out_specs=(pl.BlockSpec((GB, Do), lambda g: (g, 0)),
                   pl.BlockSpec((GB, N * Do), lambda g: (g, 0))),
        compiler_params=pltpu.CompilerParams(
            dimension_semantics=("parallel",),
            vmem_limit_bytes=32 * 1024 * 1024),
        cost_estimate=pl.CostEstimate(flops=int(flops),
                                      transcendentals=int(transcendentals),
                                      bytes_accessed=bytes_accessed),
    )(center, ctx_packed, *weights)

    return center_out, context_out.reshape(G, N, Do)


def hetero_graph(center, context, we_c, we_x, be, wa, ba, wc_x, wc_e, bc, **kw):
    """Single-graph interface matching the torch module signature.
    center: (Dc,), context: (N, Dx) -> ((Do,), (N, Do))."""
    cen_out, ctx_out = hetero_graph_batched(
        center.reshape(1, -1), context[None], we_c, we_x, be, wa, ba,
        wc_x, wc_e, bc, graphs_per_block=1, **kw)
    return cen_out.reshape(-1), ctx_out[0]


if __name__ == "__main__":
    # Shapes consistent with the module's forward-pass constraints:
    #   in_center_dim == in_context_dim == out_context_dim == 32, edge_dim == 32,
    #   N == 8 context nodes per graph, G == 64 graphs batched per pallas_call.
    G, N, Din, De, Dout = 64, 8, 32, 32, 32

    key = jax.random.PRNGKey(0)
    ks = jax.random.split(key, 10)
    scale = 0.1

    center = jax.random.normal(ks[0], (G, Din), jnp.float32)
    context = jax.random.normal(ks[1], (G, N, Din), jnp.float32)

    # NodeAttention parameters (edge projection + attention vector).
    we_c = scale * jax.random.normal(ks[2], (Din, De), jnp.float32)
    we_x = scale * jax.random.normal(ks[3], (Din, De), jnp.float32)
    be = scale * jax.random.normal(ks[4], (De,), jnp.float32)
    wa = scale * jax.random.normal(ks[5], (De,), jnp.float32)
    ba = scale * jax.random.normal(ks[6], (1,), jnp.float32)   # no-op under softmax

    # context_node_updator: Linear(in_context_dim + edge_dim, out_context_dim).
    wc_x = scale * jax.random.normal(ks[7], (Din, Dout), jnp.float32)
    wc_e = scale * jax.random.normal(ks[8], (De, Dout), jnp.float32)
    bc = scale * jax.random.normal(ks[9], (Dout,), jnp.float32)
    # center_node_updator is declared in the torch __init__ but unused in forward().

    center_out, context_out = hetero_graph_batched(
        center, context, we_c, we_x, be, wa, ba, wc_x, wc_e, bc)
    jax.block_until_ready((center_out, context_out))

    # --- pure-JAX f32 reference (per graph, vmapped) ---
    def ref_single(cen, ctx):
        h = jnp.maximum(ctx @ we_x + cen @ we_c + be, 0.0)
        a = jax.nn.softmax(h @ wa + ba[0])
        edges = a[:, None] * h
        wc_full = jnp.concatenate([wc_x, wc_e], axis=0)
        ctx_out = jnp.maximum(jnp.concatenate([ctx, edges], axis=1) @ wc_full + bc,
                              0.0) + ctx
        cen_in = jnp.concatenate([cen, jnp.mean(edges, axis=0)])
        cen_out = jnp.maximum(cen_in @ wc_full + bc, 0.0)
        return cen_out, ctx_out

    ref_cen, ref_ctx = jax.vmap(ref_single)(center, context)

    assert center_out.shape == (G, Dout)
    assert context_out.shape == (G, N, Dout)
    assert jnp.allclose(center_out, ref_cen, rtol=2e-2, atol=2e-2), \
        float(jnp.max(jnp.abs(center_out - ref_cen)))
    assert jnp.allclose(context_out, ref_ctx, rtol=2e-2, atol=2e-2), \
        float(jnp.max(jnp.abs(context_out - ref_ctx)))

    # Single-graph interface (original module signature) also works (grid=(1,)).
    c1, x1 = hetero_graph(center[0], context[0], we_c, we_x, be, wa, ba,
                          wc_x, wc_e, bc)
    jax.block_until_ready((c1, x1))
    assert c1.shape == (Dout,) and x1.shape == (N, Dout)
    assert jnp.allclose(c1, ref_cen[0], rtol=2e-2, atol=2e-2)
    assert jnp.allclose(x1, ref_ctx[0], rtol=2e-2, atol=2e-2)

    print("KERNEL_OK")
</pallas_src>

<mosaic_0001>
module attributes {stable_mosaic.version = 11 : i64} {
  func.func @hetero_graph_kernel(%arg0: i32, %arg1: memref<32x32xf32, #tpu.memory_space<vmem>>, %arg2: memref<32x256xf32, #tpu.memory_space<vmem>>, %arg3: memref<256x512xbf16, #tpu.memory_space<vmem>>, %arg4: memref<32x288xbf16, #tpu.memory_space<vmem>>, %arg5: memref<256x8xbf16, #tpu.memory_space<vmem>>, %arg6: memref<8x256xbf16, #tpu.memory_space<vmem>>, %arg7: memref<256x288xbf16, #tpu.memory_space<vmem>>, %arg8: memref<1x256xf32, #tpu.memory_space<vmem>>, %arg9: memref<1x256xf32, #tpu.memory_space<vmem>>, %arg10: memref<1x32xf32, #tpu.memory_space<vmem>>, %arg11: memref<32x32xf32, #tpu.memory_space<vmem>>, %arg12: memref<32x256xf32, #tpu.memory_space<vmem>>) attributes {dimension_semantics = [#tpu.dimension_semantics<parallel>], iteration_bounds = array<i64: 2>, scalar_prefetch = 0 : i64, scratch_operands = 0 : i64, tpu.core_type = #tpu.core_type<tc>, window_params = [{transform_indices = @transform_0, window_bounds = array<i64: 32, 32>}, {transform_indices = @transform_1, window_bounds = array<i64: 32, 256>}, {pipeline_mode = #tpu.pipeline_mode<synchronous>, transform_indices = @transform_2, window_bounds = array<i64: 256, 512>}, {pipeline_mode = #tpu.pipeline_mode<synchronous>, transform_indices = @transform_3, window_bounds = array<i64: 32, 288>}, {pipeline_mode = #tpu.pipeline_mode<synchronous>, transform_indices = @transform_4, window_bounds = array<i64: 256, 8>}, {pipeline_mode = #tpu.pipeline_mode<synchronous>, transform_indices = @transform_5, window_bounds = array<i64: 8, 256>}, {pipeline_mode = #tpu.pipeline_mode<synchronous>, transform_indices = @transform_6, window_bounds = array<i64: 256, 288>}, {pipeline_mode = #tpu.pipeline_mode<synchronous>, transform_indices = @transform_7, window_bounds = array<i64: 1, 256>}, {pipeline_mode = #tpu.pipeline_mode<synchronous>, transform_indices = @transform_8, window_bounds = array<i64: 1, 256>}, {pipeline_mode = #tpu.pipeline_mode<synchronous>, transform_indices = @transform_9, window_bounds = array<i64: 1, 32>}, {transform_indices = @transform_10, window_bounds = array<i64: 32, 32>}, {transform_indices = @transform_11, window_bounds = array<i64: 32, 256>}]} {
    %c0 = arith.constant 0 : index
    %c0_0 = arith.constant 0 : index
    %0 = vector.load %arg2[%c0, %c0_0] : memref<32x256xf32, #tpu.memory_space<vmem>>, vector<32x256xf32>
    %c0_1 = arith.constant 0 : index
    %c0_2 = arith.constant 0 : index
    %1 = vector.load %arg1[%c0_1, %c0_2] : memref<32x32xf32, #tpu.memory_space<vmem>>, vector<32x32xf32>
    %2 = arith.truncf %0 : vector<32x256xf32> to vector<32x256xbf16>
    %c0_3 = arith.constant 0 : index
    %c0_4 = arith.constant 0 : index
    %3 = vector.load %arg3[%c0_3, %c0_4] : memref<256x512xbf16, #tpu.memory_space<vmem>>, vector<256x512xbf16>
    %cst = arith.constant dense<0.000000e+00> : vector<32x512xf32>
    %4 = tpu.matmul %2, %3, %cst {dimension_numbers = #tpu.dot_dimension_numbers<[1], [0], [0], [1], [0, 0, 1, 1], [], []>} : vector<32x256xbf16>, vector<256x512xbf16>, vector<32x512xf32> -> vector<32x512xf32>
    %5 = arith.truncf %1 : vector<32x32xf32> to vector<32x32xbf16>
    %c0_5 = arith.constant 0 : index
    %c0_6 = arith.constant 0 : index
    %6 = vector.load %arg4[%c0_5, %c0_6] : memref<32x288xbf16, #tpu.memory_space<vmem>>, vector<32x288xbf16>
    %cst_7 = arith.constant dense<0.000000e+00> : vector<32x288xf32>
    %7 = tpu.matmul %5, %6, %cst_7 {dimension_numbers = #tpu.dot_dimension_numbers<[1], [0], [0], [1], [0, 0, 1, 1], [], []>} : vector<32x32xbf16>, vector<32x288xbf16>, vector<32x288xf32> -> vector<32x288xf32>
    %8 = vector.extract_strided_slice %4 {offsets = [0, 0], sizes = [32, 256], strides = [1, 1]} : vector<32x512xf32> to vector<32x256xf32>
    %9 = vector.extract_strided_slice %7 {offsets = [0, 0], sizes = [32, 256], strides = [1, 1]} : vector<32x288xf32> to vector<32x256xf32>
    %10 = arith.addf %8, %9 : vector<32x256xf32>
    %c0_8 = arith.constant 0 : index
    %c0_9 = arith.constant 0 : index
    %11 = vector.load %arg8[%c0_8, %c0_9] : memref<1x256xf32, #tpu.memory_space<vmem>>, vector<1x256xf32>
    %12 = vector.broadcast %11 : vector<1x256xf32> to vector<32x256xf32>
    %13 = arith.addf %10, %12 : vector<32x256xf32>
    %cst_10 = arith.constant 0.000000e+00 : f32
    %14 = vector.broadcast %cst_10 : f32 to vector<32x256xf32>
    %15 = arith.maximumf %13, %14 : vector<32x256xf32>
    %16 = arith.truncf %15 : vector<32x256xf32> to vector<32x256xbf16>
    %c0_11 = arith.constant 0 : index
    %c0_12 = arith.constant 0 : index
    %17 = vector.load %arg5[%c0_11, %c0_12] : memref<256x8xbf16, #tpu.memory_space<vmem>>, vector<256x8xbf16>
    %cst_13 = arith.constant dense<0.000000e+00> : vector<32x8xf32>
    %18 = tpu.matmul %16, %17, %cst_13 {dimension_numbers = #tpu.dot_dimension_numbers<[1], [0], [0], [1], [0, 0, 1, 1], [], []>} : vector<32x256xbf16>, vector<256x8xbf16>, vector<32x8xf32> -> vector<32x8xf32>
    %cst_14 = arith.constant dense<0xFF800000> : vector<32xf32>
    %19 = vector.multi_reduction <maximumf>, %18, %cst_14 [1] : vector<32x8xf32> to vector<32xf32>
    %20 = vector.shape_cast %19 : vector<32xf32> to vector<32x1xf32>
    %21 = vector.broadcast %20 : vector<32x1xf32> to vector<32x8xf32>
    %22 = arith.subf %18, %21 : vector<32x8xf32>
    %23 = math.exp %22 : vector<32x8xf32>
    %cst_15 = arith.constant dense<0.000000e+00> : vector<32xf32>
    %24 = vector.multi_reduction <add>, %23, %cst_15 [1] : vector<32x8xf32> to vector<32xf32>
    %25 = vector.shape_cast %24 : vector<32xf32> to vector<32x1xf32>
    %26 = tpu.reciprocal %25 {approx = true} : vector<32x1xf32> -> vector<32x1xf32>
    %27 = vector.broadcast %26 : vector<32x1xf32> to vector<32x8xf32>
    %28 = arith.mulf %23, %27 : vector<32x8xf32>
    %29 = arith.truncf %28 : vector<32x8xf32> to vector<32x8xbf16>
    %c0_16 = arith.constant 0 : index
    %c0_17 = arith.constant 0 : index
    %30 = vector.load %arg6[%c0_16, %c0_17] : memref<8x256xbf16, #tpu.memory_space<vmem>>, vector<8x256xbf16>
    %cst_18 = arith.constant dense<0.000000e+00> : vector<32x256xf32>
    %31 = tpu.matmul %29, %30, %cst_18 {dimension_numbers = #tpu.dot_dimension_numbers<[1], [0], [0], [1], [0, 0, 1, 1], [], []>} : vector<32x8xbf16>, vector<8x256xbf16>, vector<32x256xf32> -> vector<32x256xf32>
    %32 = arith.mulf %31, %15 : vector<32x256xf32>
    %33 = arith.truncf %32 : vector<32x256xf32> to vector<32x256xbf16>
    %c0_19 = arith.constant 0 : index
    %c0_20 = arith.constant 0 : index
    %34 = vector.load %arg7[%c0_19, %c0_20] : memref<256x288xbf16, #tpu.memory_space<vmem>>, vector<256x288xbf16>
    %cst_21 = arith.constant dense<0.000000e+00> : vector<32x288xf32>
    %35 = tpu.matmul %33, %34, %cst_21 {dimension_numbers = #tpu.dot_dimension_numbers<[1], [0], [0], [1], [0, 0, 1, 1], [], []>} : vector<32x256xbf16>, vector<256x288xbf16>, vector<32x288xf32> -> vector<32x288xf32>
    %36 = vector.extract_strided_slice %4 {offsets = [0, 256], sizes = [32, 256], strides = [1, 1]} : vector<32x512xf32> to vector<32x256xf32>
    %37 = vector.extract_strided_slice %35 {offsets = [0, 0], sizes = [32, 256], strides = [1, 1]} : vector<32x288xf32> to vector<32x256xf32>
    %38 = arith.addf %36, %37 : vector<32x256xf32>
    %c0_22 = arith.constant 0 : index
    %c0_23 = arith.constant 0 : index
    %39 = vector.load %arg9[%c0_22, %c0_23] : memref<1x256xf32, #tpu.memory_space<vmem>>, vector<1x256xf32>
    %40 = vector.broadcast %39 : vector<1x256xf32> to vector<32x256xf32>
    %41 = arith.addf %38, %40 : vector<32x256xf32>
    %cst_24 = arith.constant 0.000000e+00 : f32
    %42 = vector.broadcast %cst_24 : f32 to vector<32x256xf32>
    %43 = arith.maximumf %41, %42 : vector<32x256xf32>
    %44 = arith.addf %43, %0 : vector<32x256xf32>
    %c0_25 = arith.constant 0 : index
    %c0_26 = arith.constant 0 : index
    %45 = vector.load %arg12[%c0_25, %c0_26] : memref<32x256xf32, #tpu.memory_space<vmem>>, vector<32x256xf32>
    tpu.vector_store %arg12[%c0_25, %c0_26], %44 {strides = array<i32>} : memref<32x256xf32, #tpu.memory_space<vmem>>, vector<32x256xf32>,
    %46 = vector.extract_strided_slice %7 {offsets = [0, 256], sizes = [32, 32], strides = [1, 1]} : vector<32x288xf32> to vector<32x32xf32>
    %47 = vector.extract_strided_slice %35 {offsets = [0, 256], sizes = [32, 32], strides = [1, 1]} : vector<32x288xf32> to vector<32x32xf32>
    %48 = arith.addf %46, %47 : vector<32x32xf32>
    %c0_27 = arith.constant 0 : index
    %c0_28 = arith.constant 0 : index
    %49 = vector.load %arg10[%c0_27, %c0_28] : memref<1x32xf32, #tpu.memory_space<vmem>>, vector<1x32xf32>
    %50 = vector.broadcast %49 : vector<1x32xf32> to vector<32x32xf32>
    %51 = arith.addf %48, %50 : vector<32x32xf32>
    %cst_29 = arith.constant 0.000000e+00 : f32
    %52 = vector.broadcast %cst_29 : f32 to vector<32x32xf32>
    %53 = arith.maximumf %51, %52 : vector<32x32xf32>
    %c0_30 = arith.constant 0 : index
    %c0_31 = arith.constant 0 : index
    %54 = vector.load %arg11[%c0_30, %c0_31] : memref<32x32xf32, #tpu.memory_space<vmem>>, vector<32x32xf32>
    tpu.vector_store %arg11[%c0_30, %c0_31], %53 {strides = array<i32>} : memref<32x32xf32, #tpu.memory_space<vmem>>, vector<32x32xf32>,
    return
  }
  func.func @transform_0(%arg0: i32) -> (i32, i32) {
    %c0_i32 = arith.constant 0 : i32
    %c0_i32_0 = arith.constant 0 : i32
    return %arg0, %c0_i32 : i32, i32
  }
  func.func @transform_1(%arg0: i32) -> (i32, i32) {
    %c0_i32 = arith.constant 0 : i32
    %c0_i32_0 = arith.constant 0 : i32
    return %arg0, %c0_i32 : i32, i32
  }
  func.func @transform_2(%arg0: i32) -> (i32, i32) {
    %c0_i32 = arith.constant 0 : i32
    %c0_i32_0 = arith.constant 0 : i32
    %c0_i32_1 = arith.constant 0 : i32
    return %c0_i32, %c0_i32_0 : i32, i32
  }
  func.func @transform_3(%arg0: i32) -> (i32, i32) {
    %c0_i32 = arith.constant 0 : i32
    %c0_i32_0 = arith.constant 0 : i32
    %c0_i32_1 = arith.constant 0 : i32
    return %c0_i32, %c0_i32_0 : i32, i32
  }
  func.func @transform_4(%arg0: i32) -> (i32, i32) {
    %c0_i32 = arith.constant 0 : i32
    %c0_i32_0 = arith.constant 0 : i32
    %c0_i32_1 = arith.constant 0 : i32
    return %c0_i32, %c0_i32_0 : i32, i32
  }
  func.func @transform_5(%arg0: i32) -> (i32, i32) {
    %c0_i32 = arith.constant 0 : i32
    %c0_i32_0 = arith.constant 0 : i32
    %c0_i32_1 = arith.constant 0 : i32
    return %c0_i32, %c0_i32_0 : i32, i32
  }
  func.func @transform_6(%arg0: i32) -> (i32, i32) {
    %c0_i32 = arith.constant 0 : i32
    %c0_i32_0 = arith.constant 0 : i32
    %c0_i32_1 = arith.constant 0 : i32
    return %c0_i32, %c0_i32_0 : i32, i32
  }
  func.func @transform_7(%arg0: i32) -> (i32, i32) {
    %c0_i32 = arith.constant 0 : i32
    %c0_i32_0 = arith.constant 0 : i32
    %c0_i32_1 = arith.constant 0 : i32
    return %c0_i32, %c0_i32_0 : i32, i32
  }
  func.func @transform_8(%arg0: i32) -> (i32, i32) {
    %c0_i32 = arith.constant 0 : i32
    %c0_i32_0 = arith.constant 0 : i32
    %c0_i32_1 = arith.constant 0 : i32
    return %c0_i32, %c0_i32_0 : i32, i32
  }
  func.func @transform_9(%arg0: i32) -> (i32, i32) {
    %c0_i32 = arith.constant 0 : i32
    %c0_i32_0 = arith.constant 0 : i32
    %c0_i32_1 = arith.constant 0 : i32
    return %c0_i32, %c0_i32_0 : i32, i32
  }
  func.func @transform_10(%arg0: i32) -> (i32, i32) {
    %c0_i32 = arith.constant 0 : i32
    %c0_i32_0 = arith.constant 0 : i32
    return %arg0, %c0_i32 : i32, i32
  }
  func.func @transform_11(%arg0: i32) -> (i32, i32) {
    %c0_i32 = arith.constant 0 : i32
    %c0_i32_0 = arith.constant 0 : i32
    return %arg0, %c0_i32 : i32, i32
  }
}

</mosaic_0001>

<llo_original>
// kernel: tpu_custom_call.1
$region0: #{tpu_custom_call.1}
  #allocation0 [shape = 'u32[]', space=smem, size = 0x4, offset = 0x4, fixed_abs, tag = 'smem constant byte address 0x4 - core index']
  #allocation1 [shape = 'u32[144,128]{1,0:T(1,128)}', space=vmem, size = 0x12000, scoped, tag = 'internal scratch']
  %s0 = inlined_call_operand.vmem [shape: f32[64,32], index: 0, kind: input, shape index: {}]
  %s1 = inlined_call_operand.vmem [shape: f32[64,256], index: 1, kind: input, shape index: {}]
  %s2 = inlined_call_operand.vmem [shape: bf16[256,512], index: 2, kind: input, shape index: {}]
  %s3 = inlined_call_operand.vmem [shape: bf16[32,288], index: 3, kind: input, shape index: {}]
  %s4 = inlined_call_operand.vmem [shape: bf16[256,8], index: 4, kind: input, shape index: {}]
  %s5 = inlined_call_operand.vmem [shape: bf16[8,256], index: 5, kind: input, shape index: {}]
  %s6 = inlined_call_operand.vmem [shape: bf16[256,288], index: 6, kind: input, shape index: {}]
  %s7 = inlined_call_operand.vmem [shape: f32[1,256], index: 7, kind: input, shape index: {}]
  %s8 = inlined_call_operand.vmem [shape: f32[1,256], index: 8, kind: input, shape index: {}]
  %s9 = inlined_call_operand.vmem [shape: f32[1,32], index: 9, kind: input, shape index: {}]
  %s10 = inlined_call_operand.vmem [shape: f32[64,32], index: 10, kind: output, shape index: {0}]
  %s11 = inlined_call_operand.hbm [shape: f32[64,256], index: 11, kind: output, shape index: {1}]
  %12 = xla_tuple %s10, %s11
  %s13 = sld [smem:[#allocation0]]
  $region81: #{tpu_custom_call.1} parent=0
    _
  %s15 = ssub.s32 1, %s13
  %s16 = scalar_select 0, %s15, %s13
  $region1: #{tpu_custom_call.1} parent=0
    #allocation2 [shape = 'u8[65536]{0}', space=vmem, size = 0x10000, scoped, tag = 'output window, operand 1']
    #allocation3 [shape = 's32[2]{0}', space=sflag, size = 0x8, scoped, tag = 'scoped memory for tpu_custom_call.1']
    %17 = vsyncpa [#allocation3], 0
    %s18 = scalar_lea.sflag [#allocation3], 1
    %19 = vsyncpa %s18, 0
    loop: start=0, step=1, limit=4
    $region2: #{tpu_custom_call.1} parent=1 // loop_pre_header
      _
    $region3: #{tpu_custom_call.1} parent=1 // loop_header
      %s21 = sphi 0, %s25
      %p22 = scmp.ge.s32.totalorder %s21, 4
      %s31 = sphi 0, %s33
      %s34 = sphi 0, %s31
      %s35 = sphi 0, %s34
      %s51 = sphi 0, %s35
      %s57 = sphi 0, %s59
      %s60 = sphi 0, %s57
      %s61 = sphi 0, %s60
      %s77 = sphi 0, %s61
      %s81 = sphi 0, %s81
      %s83 = sphi 0, %s81
      %s84 = sphi 0, %s83
      %s98 = sphi 0, %s84
      %s102 = sphi 0, %s102
      %s104 = sphi 0, %s102
      %s105 = sphi 0, %s104
      %s119 = sphi 0, %s105
      %s123 = sphi 0, %s123
      %s125 = sphi 0, %s123
      %s126 = sphi 0, %s125
      %s140 = sphi 0, %s126
      %s144 = sphi 0, %s144
      %s146 = sphi 0, %s144
      %s147 = sphi 0, %s146
      %s161 = sphi 0, %s147
      %s165 = sphi 0, %s165
      %s167 = sphi 0, %s165
      %s168 = sphi 0, %s167
      %s182 = sphi 0, %s168
      %s186 = sphi 0, %s186
      %s188 = sphi 0, %s186
      %s189 = sphi 0, %s188
      %s203 = sphi 0, %s189
      %s207 = sphi 0, %s207
      %s209 = sphi 0, %s207
      %s210 = sphi 0, %s209
      %s224 = sphi 0, %s210
      %s228 = sphi 0, %s228
      %s230 = sphi 0, %s228
      %s231 = sphi 0, %s230
      %s245 = sphi 0, %s231
      %s251 = sphi 0, %s253
      %s254 = sphi 0, %s251
      %s255 = sphi 0, %s254
      %s271 = sphi 0, %s255
      %s277 = sphi 0, %s279
      %s280 = sphi 0, %s277
      %s281 = sphi 0, %s280
      %s297 = sphi 0, %s281
    $region4: #{tpu_custom_call.1} parent=1 // loop_header_branch
      %24 = sbr.rel (%p22) target = $region8
    $region5: #{tpu_custom_call.1} parent=1 // loop_body
      %s26 = ssub.s32 %s21, 1
      %s27 = ssub.s32 %s21, 2
      %s28 = sadd.s32 %s21, 1
      %s29 = ssub.s32 %s21, %s28
      %p30 = scmp.eq.s32.totalorder %s29, 0
      %s32 = sadd.s32 %s31, 1
      %s33 = scalar_select %p30, %s31, %s32
      %p36 = pneg %p30
      %p37 = scmp.eq.s32.totalorder %s21, 1
      %p38 = por %p36, %p37
      %p39 = scmp.ne.s32.totalorder %s31, %s34
      %p40 = scmp.eq.s32.totalorder %s21, 0
      %p41 = por %p39, %p40
      %p42 = scmp.ne.s32.totalorder %s31, %s34
      %p43 = scmp.eq.s32.totalorder %s26, 1
      %p44 = por %p42, %p43
      %p45 = scmp.ne.s32.totalorder %s34, %s35
      %p46 = scmp.eq.s32.totalorder %s26, 0
      %p47 = por %p45, %p46
      %p48 = scmp.ne.s32.totalorder %s34, %s35
      %p49 = scmp.eq.s32.totalorder %s27, 1
      %p50 = por %p48, %p49
      %p52 = scmp.ne.s32.totalorder %s35, %s51
      %p53 = scmp.eq.s32.totalorder %s27, 0
      %p54 = por %p52, %p53
      %s55 = ssub.s32 %s21, %s28
      %p56 = scmp.eq.s32.totalorder %s55, 0
      %s58 = sadd.s32 %s57, 1
      %s59 = scalar_select %p56, %s57, %s58
      %p62 = pneg %p56
      %p63 = scmp.eq.s32.totalorder %s21, 1
      %p64 = por %p62, %p63
      %p65 = scmp.ne.s32.totalorder %s57, %s60
      %p66 = scmp.eq.s32.totalorder %s21, 0
      %p67 = por %p65, %p66
      %p68 = scmp.ne.s32.totalorder %s57, %s60
      %p69 = scmp.eq.s32.totalorder %s26, 1
      %p70 = por %p68, %p69
      %p71 = scmp.ne.s32.totalorder %s60, %s61
      %p72 = scmp.eq.s32.totalorder %s26, 0
      %p73 = por %p71, %p72
      %p74 = scmp.ne.s32.totalorder %s60, %s61
      %p75 = scmp.eq.s32.totalorder %s27, 1
      %p76 = por %p74, %p75
      %p78 = scmp.ne.s32.totalorder %s61, %s77
      %p79 = scmp.eq.s32.totalorder %s27, 0
      %p80 = por %p78, %p79
      %s82 = sadd.s32 %s81, 1
      %p85 = scmp.eq.s32.totalorder %s21, 1
      %p86 = scmp.ne.s32.totalorder %s81, %s83
      %p87 = scmp.eq.s32.totalorder %s21, 0
      %p88 = por %p86, %p87
      %p89 = scmp.ne.s32.totalorder %s81, %s83
      %p90 = scmp.eq.s32.totalorder %s26, 1
      %p91 = por %p89, %p90
      %p92 = scmp.ne.s32.totalorder %s83, %s84
      %p93 = scmp.eq.s32.totalorder %s26, 0
      %p94 = por %p92, %p93
      %p95 = scmp.ne.s32.totalorder %s83, %s84
      %p96 = scmp.eq.s32.totalorder %s27, 1
      %p97 = por %p95, %p96
      %p99 = scmp.ne.s32.totalorder %s84, %s98
      %p100 = scmp.eq.s32.totalorder %s27, 0
      %p101 = por %p99, %p100
      %s103 = sadd.s32 %s102, 1
      %p106 = scmp.eq.s32.totalorder %s21, 1
      %p107 = scmp.ne.s32.totalorder %s102, %s104
      %p108 = scmp.eq.s32.totalorder %s21, 0
      %p109 = por %p107, %p108
      %p110 = scmp.ne.s32.totalorder %s102, %s104
      %p111 = scmp.eq.s32.totalorder %s26, 1
      %p112 = por %p110, %p111
      %p113 = scmp.ne.s32.totalorder %s104, %s105
      %p114 = scmp.eq.s32.totalorder %s26, 0
      %p115 = por %p113, %p114
      %p116 = scmp.ne.s32.totalorder %s104, %s105
      %p117 = scmp.eq.s32.totalorder %s27, 1
      %p118 = por %p116, %p117
      %p120 = scmp.ne.s32.totalorder %s105, %s119
      %p121 = scmp.eq.s32.totalorder %s27, 0
      %p122 = por %p120, %p121
      %s124 = sadd.s32 %s123, 1
      %p127 = scmp.eq.s32.totalorder %s21, 1
      %p128 = scmp.ne.s32.totalorder %s123, %s125
      %p129 = scmp.eq.s32.totalorder %s21, 0
      %p130 = por %p128, %p129
      %p131 = scmp.ne.s32.totalorder %s123, %s125
      %p132 = scmp.eq.s32.totalorder %s26, 1
      %p133 = por %p131, %p132
      %p134 = scmp.ne.s32.totalorder %s125, %s126
      %p135 = scmp.eq.s32.totalorder %s26, 0
      %p136 = por %p134, %p135
      %p137 = scmp.ne.s32.totalorder %s125, %s126
      %p138 = scmp.eq.s32.totalorder %s27, 1
      %p139 = por %p137, %p138
      %p141 = scmp.ne.s32.totalorder %s126, %s140
      %p142 = scmp.eq.s32.totalorder %s27, 0
      %p143 = por %p141, %p142
      %s145 = sadd.s32 %s144, 1
      %p148 = scmp.eq.s32.totalorder %s21, 1
      %p149 = scmp.ne.s32.totalorder %s144, %s146
      %p150 = scmp.eq.s32.totalorder %s21, 0
      %p151 = por %p149, %p150
      %p152 = scmp.ne.s32.totalorder %s144, %s146
      %p153 = scmp.eq.s32.totalorder %s26, 1
      %p154 = por %p152, %p153
      %p155 = scmp.ne.s32.totalorder %s146, %s147
      %p156 = scmp.eq.s32.totalorder %s26, 0
      %p157 = por %p155, %p156
      %p158 = scmp.ne.s32.totalorder %s146, %s147
      %p159 = scmp.eq.s32.totalorder %s27, 1
      %p160 = por %p158, %p159
      %p162 = scmp.ne.s32.totalorder %s147, %s161
      %p163 = scmp.eq.s32.totalorder %s27, 0
      %p164 = por %p162, %p163
      %s166 = sadd.s32 %s165, 1
      %p169 = scmp.eq.s32.totalorder %s21, 1
      %p170 = scmp.ne.s32.totalorder %s165, %s167
      %p171 = scmp.eq.s32.totalorder %s21, 0
      %p172 = por %p170, %p171
      %p173 = scmp.ne.s32.totalorder %s165, %s167
      %p174 = scmp.eq.s32.totalorder %s26, 1
      %p175 = por %p173, %p174
      %p176 = scmp.ne.s32.totalorder %s167, %s168
      %p177 = scmp.eq.s32.totalorder %s26, 0
      %p178 = por %p176, %p177
      %p179 = scmp.ne.s32.totalorder %s167, %s168
      %p180 = scmp.eq.s32.totalorder %s27, 1
      %p181 = por %p179, %p180
      %p183 = scmp.ne.s32.totalorder %s168, %s182
      %p184 = scmp.eq.s32.totalorder %s27, 0
      %p185 = por %p183, %p184
      %s187 = sadd.s32 %s186, 1
      %p190 = scmp.eq.s32.totalorder %s21, 1
      %p191 = scmp.ne.s32.totalorder %s186, %s188
      %p192 = scmp.eq.s32.totalorder %s21, 0
      %p193 = por %p191, %p192
      %p194 = scmp.ne.s32.totalorder %s186, %s188
      %p195 = scmp.eq.s32.totalorder %s26, 1
      %p196 = por %p194, %p195
      %p197 = scmp.ne.s32.totalorder %s188, %s189
      %p198 = scmp.eq.s32.totalorder %s26, 0
      %p199 = por %p197, %p198
      %p200 = scmp.ne.s32.totalorder %s188, %s189
      %p201 = scmp.eq.s32.totalorder %s27, 1
      %p202 = por %p200, %p201
      %p204 = scmp.ne.s32.totalorder %s189, %s203
      %p205 = scmp.eq.s32.totalorder %s27, 0
      %p206 = por %p204, %p205
      %s208 = sadd.s32 %s207, 1
      %p211 = scmp.eq.s32.totalorder %s21, 1
      %p212 = scmp.ne.s32.totalorder %s207, %s209
      %p213 = scmp.eq.s32.totalorder %s21, 0
      %p214 = por %p212, %p213
      %p215 = scmp.ne.s32.totalorder %s207, %s209
      %p216 = scmp.eq.s32.totalorder %s26, 1
      %p217 = por %p215, %p216
      %p218 = scmp.ne.s32.totalorder %s209, %s210
      %p219 = scmp.eq.s32.totalorder %s26, 0
      %p220 = por %p218, %p219
      %p221 = scmp.ne.s32.totalorder %s209, %s210
      %p222 = scmp.eq.s32.totalorder %s27, 1
      %p223 = por %p221, %p222
      %p225 = scmp.ne.s32.totalorder %s210, %s224
      %p226 = scmp.eq.s32.totalorder %s27, 0
      %p227 = por %p225, %p226
      %s229 = sadd.s32 %s228, 1
      %p232 = scmp.eq.s32.totalorder %s21, 1
      %p233 = scmp.ne.s32.totalorder %s228, %s230
      %p234 = scmp.eq.s32.totalorder %s21, 0
      %p235 = por %p233, %p234
      %p236 = scmp.ne.s32.totalorder %s228, %s230
      %p237 = scmp.eq.s32.totalorder %s26, 1
      %p238 = por %p236, %p237
      %p239 = scmp.ne.s32.totalorder %s230, %s231
      %p240 = scmp.eq.s32.totalorder %s26, 0
      %p241 = por %p239, %p240
      %p242 = scmp.ne.s32.totalorder %s230, %s231
      %p243 = scmp.eq.s32.totalorder %s27, 1
      %p244 = por %p242, %p243
      %p246 = scmp.ne.s32.totalorder %s231, %s245
      %p247 = scmp.eq.s32.totalorder %s27, 0
      %p248 = por %p246, %p247
      %s249 = ssub.s32 %s21, %s28
      %p250 = scmp.eq.s32.totalorder %s249, 0
      %s252 = sadd.s32 %s251, 1
      %s253 = scalar_select %p250, %s251, %s252
      %p256 = pneg %p250
      %p257 = scmp.eq.s32.totalorder %s21, 1
      %p258 = por %p256, %p257
      %p259 = scmp.ne.s32.totalorder %s251, %s254
      %p260 = scmp.eq.s32.totalorder %s21, 0
      %p261 = por %p259, %p260
      %p262 = scmp.ne.s32.totalorder %s251, %s254
      %p263 = scmp.eq.s32.totalorder %s26, 1
      %p264 = por %p262, %p263
      %p265 = scmp.ne.s32.totalorder %s254, %s255
      %p266 = scmp.eq.s32.totalorder %s26, 0
      %p267 = por %p265, %p266
      %p268 = scmp.ne.s32.totalorder %s254, %s255
      %p269 = scmp.eq.s32.totalorder %s27, 1
      %p270 = por %p268, %p269
      %p272 = scmp.ne.s32.totalorder %s255, %s271
      %p273 = scmp.eq.s32.totalorder %s27, 0
      %p274 = por %p272, %p273
      %s275 = ssub.s32 %s21, %s28
      %p276 = scmp.eq.s32.totalorder %s275, 0
      %s278 = sadd.s32 %s277, 1
      %s279 = scalar_select %p276, %s277, %s278
      %p282 = pneg %p276
      %p283 = scmp.eq.s32.totalorder %s21, 1
      %p284 = por %p282, %p283
      %p285 = scmp.ne.s32.totalorder %s277, %s280
      %p286 = scmp.eq.s32.totalorder %s21, 0
      %p287 = por %p285, %p286
      %p288 = scmp.ne.s32.totalorder %s277, %s280
      %p289 = scmp.eq.s32.totalorder %s26, 1
      %p290 = por %p288, %p289
      %p291 = scmp.ne.s32.totalorder %s280, %s281
      %p292 = scmp.eq.s32.totalorder %s26, 0
      %p293 = por %p291, %p292
      %p294 = scmp.ne.s32.totalorder %s280, %s281
      %p295 = scmp.eq.s32.totalorder %s27, 1
      %p296 = por %p294, %p295
      %p298 = scmp.ne.s32.totalorder %s281, %s297
      %p299 = scmp.eq.s32.totalorder %s27, 0
      %p300 = por %p298, %p299
      %p301 = scmp.le.s32.totalorder 1, %s21
      %p302 = scmp.lt.s32.totalorder %s21, 3
      %p303 = pnand %p301, %p302
      %p304 = pneg %p303
      // Predicated region
      $region9: #{tpu_custom_call.1} parent=5 // pred_check
        _
      $region10: #{tpu_custom_call.1} parent=5 // pred_check_branch
        %306 = sbr.rel (%p303) target = $region12
      $region11: #{tpu_custom_call.1} parent=5 // pred_region
        %s307 = ssub.s32 %s21, 1
        // Predicated region
        $region13: #{tpu_custom_call.1} parent=11 // pred_check
          %p308 = pneg %p94
        $region14: #{tpu_custom_call.1} parent=11 // pred_check_branch
          %310 = sbr.rel (%p308) target = $region16
        $region15: #{tpu_custom_call.1} parent=11 // pred_region
          _
        $region16: #{tpu_custom_call.1} parent=11 // pred_fallthru
          _
        // Predicated region
        $region17: #{tpu_custom_call.1} parent=11 // pred_check
          %p311 = pneg %p115
        $region18: #{tpu_custom_call.1} parent=11 // pred_check_branch
          %313 = sbr.rel (%p311) target = $region20
        $region19: #{tpu_custom_call.1} parent=11 // pred_region
          _
        $region20: #{tpu_custom_call.1} parent=11 // pred_fallthru
          _
        // Predicated region
        $region21: #{tpu_custom_call.1} parent=11 // pred_check
          %p314 = pneg %p136
        $region22: #{tpu_custom_call.1} parent=11 // pred_check_branch
          %316 = sbr.rel (%p314) target = $region24
        $region23: #{tpu_custom_call.1} parent=11 // pred_region
          _
        $region24: #{tpu_custom_call.1} parent=11 // pred_fallthru
          _
        // Predicated region
        $region25: #{tpu_custom_call.1} parent=11 // pred_check
          %p317 = pneg %p157
        $region26: #{tpu_custom_call.1} parent=11 // pred_check_branch
          %319 = sbr.rel (%p317) target = $region28
        $region27: #{tpu_custom_call.1} parent=11 // pred_region
          _
        $region28: #{tpu_custom_call.1} parent=11 // pred_fallthru
          _
        // Predicated region
        $region29: #{tpu_custom_call.1} parent=11 // pred_check
          %p320 = pneg %p178
        $region30: #{tpu_custom_call.1} parent=11 // pred_check_branch
          %322 = sbr.rel (%p320) target = $region32
        $region31: #{tpu_custom_call.1} parent=11 // pred_region
          _
        $region32: #{tpu_custom_call.1} parent=11 // pred_fallthru
          _
        // Predicated region
        $region33: #{tpu_custom_call.1} parent=11 // pred_check
          %p323 = pneg %p199
        $region34: #{tpu_custom_call.1} parent=11 // pred_check_branch
          %325 = sbr.rel (%p323) target = $region36
        $region35: #{tpu_custom_call.1} parent=11 // pred_region
          _
        $region36: #{tpu_custom_call.1} parent=11 // pred_fallthru
          _
        // Predicated region
        $region37: #{tpu_custom_call.1} parent=11 // pred_check
          %p326 = pneg %p220
        $region38: #{tpu_custom_call.1} parent=11 // pred_check_branch
          %328 = sbr.rel (%p326) target = $region40
        $region39: #{tpu_custom_call.1} parent=11 // pred_region
          _
        $region40: #{tpu_custom_call.1} parent=11 // pred_fallthru
          _
        // Predicated region
        $region41: #{tpu_custom_call.1} parent=11 // pred_check
          %p329 = pneg %p241
        $region42: #{tpu_custom_call.1} parent=11 // pred_check_branch
          %331 = sbr.rel (%p329) target = $region44
        $region43: #{tpu_custom_call.1} parent=11 // pred_region
          _
        $region44: #{tpu_custom_call.1} parent=11 // pred_fallthru
          _
      $region12: #{tpu_custom_call.1} parent=5 // pred_fallthru
        _
      %p332 = scmp.lt.s32.totalorder %s21, 2
      // Predicated region
      $region45: #{tpu_custom_call.1} parent=5 // pred_check
        %p333 = pneg %p332
      $region46: #{tpu_custom_call.1} parent=5 // pred_check_branch
        %335 = sbr.rel (%p333) target = $region48
      $region47: #{tpu_custom_call.1} parent=5 // pred_region
        // Predicated region
        $region49: #{tpu_custom_call.1} parent=47 // pred_check
          %p336 = pneg %p41
        $region50: #{tpu_custom_call.1} parent=47 // pred_check_branch
          %338 = sbr.rel (%p336) target = $region52
        $region51: #{tpu_custom_call.1} parent=47 // pred_region
          %s339 = smul.u32 4, %s21
          %p340 = scmp.lt.s32.totalorder %s339, 7
          %s341 = scalar_select %p340, %s339, 7
          %s342 = smul.addr %s341, 8
          %s343 = scalar_lea.vmem %s0, %s342
          %s344 = smul.u32 4, %s21
        $region52: #{tpu_custom_call.1} parent=47 // pred_fallthru
          _
        // Predicated region
        $region53: #{tpu_custom_call.1} parent=47 // pred_check
          %p345 = pneg %p67
        $region54: #{tpu_custom_call.1} parent=47 // pred_check_branch
          %347 = sbr.rel (%p345) target = $region56
        $region55: #{tpu_custom_call.1} parent=47 // pred_region
          %s348 = smul.u32 4, %s21
          %p349 = scmp.lt.s32.totalorder %s348, 7
          %s350 = scalar_select %p349, %s348, 7
          %s351 = smul.addr %s350, 2
          %s352 = smul.addr %s351, 8
          %s353 = scalar_lea.vmem %s1, %s352
          %s354 = smul.u32 4, %s21
        $region56: #{tpu_custom_call.1} parent=47 // pred_fallthru
          _
      $region48: #{tpu_custom_call.1} parent=5 // pred_fallthru
        _
      %p355 = scmp.le.s32.totalorder 1, %s21
      %p356 = scmp.lt.s32.totalorder %s21, 3
      %p357 = pnand %p355, %p356
      %p358 = pneg %p357
      // Predicated region
      $region57: #{tpu_custom_call.1} parent=5 // pred_check
        _
      $region58: #{tpu_custom_call.1} parent=5 // pred_check_branch
        %360 = sbr.rel (%p357) target = $region60
      $region59: #{tpu_custom_call.1} parent=5 // pred_region
        %s361 = ssub.s32 %s21, 1
        %s362 = smul.u32 4, %s26
        %p363 = scmp.lt.s32.totalorder %s362, 7
        %s364 = scalar_select %p363, %s362, 7
        %s365 = smul.addr %s364, 8
        %s366 = scalar_lea.vmem %s0, %s365
        %p367 = pneg %p47
        %p368 = pneg %p44
        %s369 = smul.u32 4, %s26
        %p370 = scmp.lt.s32.totalorder %s369, 7
        %s371 = scalar_select %p370, %s369, 7
        %s372 = smul.addr %s371, 2
        %s373 = smul.addr %s372, 8
        %s374 = scalar_lea.vmem %s1, %s373
        %p375 = pneg %p73
        %p376 = pneg %p70
        %p377 = pneg %p94
        %p378 = pneg %p91
        %p379 = pneg %p115
        %p380 = pneg %p112
        %p381 = pneg %p136
        %p382 = pneg %p133
        %p383 = pneg %p157
        %p384 = pneg %p154
        %p385 = pneg %p178
        %p386 = pneg %p175
        %p387 = pneg %p199
        %p388 = pneg %p196
        %p389 = pneg %p220
        %p390 = pneg %p217
        %p391 = pneg %p241
        %p392 = pneg %p238
        %p393 = pneg %p267
        %p394 = pneg %p264
        %s395 = smul.u32 4, %s26
        %p396 = scmp.lt.s32.totalorder %s395, 7
        %s397 = scalar_select %p396, %s395, 7
        %s398 = smul.addr %s397, 8
        %s399 = scalar_lea.vmem %s10, %s398
        %p400 = pneg %p293
        %p401 = pneg %p290
        %s402 = sand.u32 %s280, 1
        %s403 = scalar_lea.sflag [#allocation3], %s402
        %s404 = sand.u32 %s280, 1
        %s405 = smul.addr %s404, 64
        %s406 = scalar_lea.vmem [#allocation2], %s405
        %s407 = smul.u32 4, %s26
        %p408 = scmp.lt.s32.totalorder %s407, 7
        %s409 = scalar_select %p408, %s407, 7
        %s410 = smul.addr %s409, 8
        %s411 = scalar_lea.vmem %s0, %s410
        %s412 = smul.u32 4, %s26
        %s413 = smul.u32 4, %s26
        %p414 = scmp.lt.s32.totalorder %s413, 7
        %s415 = scalar_select %p414, %s413, 7
        %s416 = smul.addr %s415, 2
        %s417 = smul.addr %s416, 8
        %s418 = scalar_lea.vmem %s1, %s417
        %s419 = smul.u32 4, %s26
        %s420 = smul.u32 4, %s26
        %p421 = scmp.lt.s32.totalorder %s420, 7
        %s422 = scalar_select %p421, %s420, 7
        %s423 = smul.addr %s422, 8
        %s424 = scalar_lea.vmem %s10, %s423
        %s425 = smul.u32 4, %s26
        %s426 = smul.u32 4, %s26
        %v428 = vld [vmem:[%s418] sm:$0xff]
        %v429 = vld [vmem:[%s418 + $0x8] sm:$0xff]
        %v430 = vld [vmem:[%s418 + $0x10] sm:$0xff]
        %v431 = vld [vmem:[%s418 + $0x18] sm:$0xff]
        %v432 = vld [vmem:[%s418 + $0x20] sm:$0xff]
        %v433 = vld [vmem:[%s418 + $0x28] sm:$0xff]
        %v434 = vld [vmem:[%s418 + $0x30] sm:$0xff]
        %v435 = vld [vmem:[%s418 + $0x38] sm:$0xff]
        %v436 = vld [vmem:[%s411] sm:$0xff]
        %v437 = vld [vmem:[%s411 + $0x8] sm:$0xff]
        %v438 = vld [vmem:[%s411 + $0x10] sm:$0xff]
        %v439 = vld [vmem:[%s411 + $0x18] sm:$0xff]
        %v440 = vpack.c.bf16 %v430, %v428
        %v441 = vpack.c.bf16 %v431, %v429
        %v442 = vpack.c.bf16 %v434, %v432
        %v443 = vpack.c.bf16 %v435, %v433
        %v444 = vld [vmem:[%s2] sm:$0xff]
        %v445 = vld [vmem:[%s2 + $0x8] sm:$0xff]
        %v446 = vld [vmem:[%s2 + $0x10] sm:$0xff]
        %v447 = vld [vmem:[%s2 + $0x18] sm:$0xff]
        %v448 = vld [vmem:[%s2 + $0x20] sm:$0xff]
        %v449 = vld [vmem:[%s2 + $0x28] sm:$0xff]
        %v450 = vld [vmem:[%s2 + $0x30] sm:$0xff]
        %v451 = vld [vmem:[%s2 + $0x38] sm:$0xff]
        %v452 = vld [vmem:[%s2 + $0x40] sm:$0xff]
        %v453 = vld [vmem:[%s2 + $0x48] sm:$0xff]
        %v454 = vld [vmem:[%s2 + $0x50] sm:$0xff]
        %v455 = vld [vmem:[%s2 + $0x58] sm:$0xff]
        %v456 = vld [vmem:[%s2 + $0x60] sm:$0xff]
        %v457 = vld [vmem:[%s2 + $0x68] sm:$0xff]
        %v458 = vld [vmem:[%s2 + $0x70] sm:$0xff]
        %v459 = vld [vmem:[%s2 + $0x78] sm:$0xff]
        %v460 = vld [vmem:[%s2 + $0x80] sm:$0xff]
        %v461 = vld [vmem:[%s2 + $0x88] sm:$0xff]
        %v462 = vld [vmem:[%s2 + $0x90] sm:$0xff]
        %v463 = vld [vmem:[%s2 + $0x98] sm:$0xff]
        %v464 = vld [vmem:[%s2 + $0xa0] sm:$0xff]
        %v465 = vld [vmem:[%s2 + $0xa8] sm:$0xff]
        %v466 = vld [vmem:[%s2 + $0xb0] sm:$0xff]
        %v467 = vld [vmem:[%s2 + $0xb8] sm:$0xff]
        %v468 = vld [vmem:[%s2 + $0xc0] sm:$0xff]
        %v469 = vld [vmem:[%s2 + $0xc8] sm:$0xff]
        %v470 = vld [vmem:[%s2 + $0xd0] sm:$0xff]
        %v471 = vld [vmem:[%s2 + $0xd8] sm:$0xff]
        %v472 = vld [vmem:[%s2 + $0xe0] sm:$0xff]
        %v473 = vld [vmem:[%s2 + $0xe8] sm:$0xff]
        %v474 = vld [vmem:[%s2 + $0xf0] sm:$0xff]
        %v475 = vld [vmem:[%s2 + $0xf8] sm:$0xff]
        %v476 = vld [vmem:[%s2 + $0x100] sm:$0xff]
        %v477 = vld [vmem:[%s2 + $0x108] sm:$0xff]
        %v478 = vld [vmem:[%s2 + $0x110] sm:$0xff]
        %v479 = vld [vmem:[%s2 + $0x118] sm:$0xff]
        %v480 = vld [vmem:[%s2 + $0x120] sm:$0xff]
        %v481 = vld [vmem:[%s2 + $0x128] sm:$0xff]
        %v482 = vld [vmem:[%s2 + $0x130] sm:$0xff]
        %v483 = vld [vmem:[%s2 + $0x138] sm:$0xff]
        %v484 = vld [vmem:[%s2 + $0x140] sm:$0xff]
        %v485 = vld [vmem:[%s2 + $0x148] sm:$0xff]
        %v486 = vld [vmem:[%s2 + $0x150] sm:$0xff]
        %v487 = vld [vmem:[%s2 + $0x158] sm:$0xff]
        %v488 = vld [vmem:[%s2 + $0x160] sm:$0xff]
        %v489 = vld [vmem:[%s2 + $0x168] sm:$0xff]
        %v490 = vld [vmem:[%s2 + $0x170] sm:$0xff]
        %v491 = vld [vmem:[%s2 + $0x178] sm:$0xff]
        %v492 = vld [vmem:[%s2 + $0x180] sm:$0xff]
        %v493 = vld [vmem:[%s2 + $0x188] sm:$0xff]
        %v494 = vld [vmem:[%s2 + $0x190] sm:$0xff]
        %v495 = vld [vmem:[%s2 + $0x198] sm:$0xff]
        %v496 = vld [vmem:[%s2 + $0x1a0] sm:$0xff]
        %v497 = vld [vmem:[%s2 + $0x1a8] sm:$0xff]
        %v498 = vld [vmem:[%s2 + $0x1b0] sm:$0xff]
        %v499 = vld [vmem:[%s2 + $0x1b8] sm:$0xff]
        %v500 = vld [vmem:[%s2 + $0x1c0] sm:$0xff]
        %v501 = vld [vmem:[%s2 + $0x1c8] sm:$0xff]
        %v502 = vld [vmem:[%s2 + $0x1d0] sm:$0xff]
        %v503 = vld [vmem:[%s2 + $0x1d8] sm:$0xff]
        %v504 = vld [vmem:[%s2 + $0x1e0] sm:$0xff]
        %v505 = vld [vmem:[%s2 + $0x1e8] sm:$0xff]
        %v506 = vld [vmem:[%s2 + $0x1f0] sm:$0xff]
        %v507 = vld [vmem:[%s2 + $0x1f8] sm:$0xff]
        %v572 = vunpack.c.l.b16 %v444
        %v573 = vunpack.c.h.b16 %v444
        %v574 = vunpack.c.l.b16 %v445
        %v575 = vunpack.c.h.b16 %v445
        %v576 = vunpack.c.l.b16 %v446
        %v577 = vunpack.c.h.b16 %v446
        %v578 = vunpack.c.l.b16 %v447
        %v579 = vunpack.c.h.b16 %v447
        %v580 = vunpack.c.l.b16 %v448
        %v581 = vunpack.c.h.b16 %v448
        %v582 = vunpack.c.l.b16 %v449
        %v583 = vunpack.c.h.b16 %v449
        %v584 = vunpack.c.l.b16 %v450
        %v585 = vunpack.c.h.b16 %v450
        %v586 = vunpack.c.l.b16 %v451
        %v587 = vunpack.c.h.b16 %v451
        %v588 = vunpack.c.l.b16 %v452
        %v589 = vunpack.c.h.b16 %v452
        %v590 = vunpack.c.l.b16 %v453
        %v591 = vunpack.c.h.b16 %v453
        %v592 = vunpack.c.l.b16 %v454
        %v593 = vunpack.c.h.b16 %v454
        %v594 = vunpack.c.l.b16 %v455
        %v595 = vunpack.c.h.b16 %v455
        %v596 = vunpack.c.l.b16 %v456
        %v597 = vunpack.c.h.b16 %v456
        %v598 = vunpack.c.l.b16 %v457
        %v599 = vunpack.c.h.b16 %v457
        %v600 = vunpack.c.l.b16 %v458
        %v601 = vunpack.c.h.b16 %v458
        %v602 = vunpack.c.l.b16 %v459
        %v603 = vunpack.c.h.b16 %v459
        %v604 = vunpack.c.l.b16 %v460
        %v605 = vunpack.c.h.b16 %v460
        %v606 = vunpack.c.l.b16 %v461
        %v607 = vunpack.c.h.b16 %v461
        %v608 = vunpack.c.l.b16 %v462
        %v609 = vunpack.c.h.b16 %v462
        %v610 = vunpack.c.l.b16 %v463
        %v611 = vunpack.c.h.b16 %v463
        %v612 = vunpack.c.l.b16 %v464
        %v613 = vunpack.c.h.b16 %v464
        %v614 = vunpack.c.l.b16 %v465
        %v615 = vunpack.c.h.b16 %v465
        %v616 = vunpack.c.l.b16 %v466
        %v617 = vunpack.c.h.b16 %v466
        %v618 = vunpack.c.l.b16 %v467
        %v619 = vunpack.c.h.b16 %v467
        %v620 = vunpack.c.l.b16 %v468
        %v621 = vunpack.c.h.b16 %v468
        %v622 = vunpack.c.l.b16 %v469
        %v623 = vunpack.c.h.b16 %v469
        %v624 = vunpack.c.l.b16 %v470
        %v625 = vunpack.c.h.b16 %v470
        %v626 = vunpack.c.l.b16 %v471
        %v627 = vunpack.c.h.b16 %v471
        %v628 = vunpack.c.l.b16 %v472
        %v629 = vunpack.c.h.b16 %v472
        %v630 = vunpack.c.l.b16 %v473
        %v631 = vunpack.c.h.b16 %v473
        %v632 = vunpack.c.l.b16 %v474
        %v633 = vunpack.c.h.b16 %v474
        %v634 = vunpack.c.l.b16 %v475
        %v635 = vunpack.c.h.b16 %v475
        %v636 = vunpack.c.l.b16 %v476
        %v637 = vunpack.c.h.b16 %v476
        %v638 = vunpack.c.l.b16 %v477
        %v639 = vunpack.c.h.b16 %v477
        %v640 = vunpack.c.l.b16 %v478
        %v641 = vunpack.c.h.b16 %v478
        %v642 = vunpack.c.l.b16 %v479
        %v643 = vunpack.c.h.b16 %v479
        %v644 = vunpack.c.l.b16 %v480
        %v645 = vunpack.c.h.b16 %v480
        %v646 = vunpack.c.l.b16 %v481
        %v647 = vunpack.c.h.b16 %v481
        %v648 = vunpack.c.l.b16 %v482
        %v649 = vunpack.c.h.b16 %v482
        %v650 = vunpack.c.l.b16 %v483
        %v651 = vunpack.c.h.b16 %v483
        %v652 = vunpack.c.l.b16 %v484
        %v653 = vunpack.c.h.b16 %v484
        %v654 = vunpack.c.l.b16 %v485
        %v655 = vunpack.c.h.b16 %v485
        %v656 = vunpack.c.l.b16 %v486
        %v657 = vunpack.c.h.b16 %v486
        %v658 = vunpack.c.l.b16 %v487
        %v659 = vunpack.c.h.b16 %v487
        %v660 = vunpack.c.l.b16 %v488
        %v661 = vunpack.c.h.b16 %v488
        %v662 = vunpack.c.l.b16 %v489
        %v663 = vunpack.c.h.b16 %v489
        %v664 = vunpack.c.l.b16 %v490
        %v665 = vunpack.c.h.b16 %v490
        %v666 = vunpack.c.l.b16 %v491
        %v667 = vunpack.c.h.b16 %v491
        %v668 = vunpack.c.l.b16 %v492
        %v669 = vunpack.c.h.b16 %v492
        %v670 = vunpack.c.l.b16 %v493
        %v671 = vunpack.c.h.b16 %v493
        %v672 = vunpack.c.l.b16 %v494
        %v673 = vunpack.c.h.b16 %v494
        %v674 = vunpack.c.l.b16 %v495
        %v675 = vunpack.c.h.b16 %v495
        %v676 = vunpack.c.l.b16 %v496
        %v677 = vunpack.c.h.b16 %v496
        %v678 = vunpack.c.l.b16 %v497
        %v679 = vunpack.c.h.b16 %v497
        %v680 = vunpack.c.l.b16 %v498
        %v681 = vunpack.c.h.b16 %v498
        %v682 = vunpack.c.l.b16 %v499
        %v683 = vunpack.c.h.b16 %v499
        %v684 = vunpack.c.l.b16 %v500
        %v685 = vunpack.c.h.b16 %v500
        %v686 = vunpack.c.l.b16 %v501
        %v687 = vunpack.c.h.b16 %v501
        %v688 = vunpack.c.l.b16 %v502
        %v689 = vunpack.c.h.b16 %v502
        %v690 = vunpack.c.l.b16 %v503
        %v691 = vunpack.c.h.b16 %v503
        %v692 = vunpack.c.l.b16 %v504
        %v693 = vunpack.c.h.b16 %v504
        %v694 = vunpack.c.l.b16 %v505
        %v695 = vunpack.c.h.b16 %v505
        %v696 = vunpack.c.l.b16 %v506
        %v697 = vunpack.c.h.b16 %v506
        %v698 = vunpack.c.l.b16 %v507
        %v699 = vunpack.c.h.b16 %v507
        %v700 = vpack.c.b16 %v576, %v572
        %v701 = vpack.c.b16 %v577, %v573
        %v702 = vpack.c.b16 %v578, %v574
        %v703 = vpack.c.b16 %v579, %v575
        %v704 = vpack.c.b16 %v584, %v580
        %v705 = vpack.c.b16 %v585, %v581
        %v706 = vpack.c.b16 %v586, %v582
        %v707 = vpack.c.b16 %v587, %v583
        %v708 = vpack.c.b16 %v592, %v588
        %v709 = vpack.c.b16 %v593, %v589
        %v710 = vpack.c.b16 %v594, %v590
        %v711 = vpack.c.b16 %v595, %v591
        %v712 = vpack.c.b16 %v600, %v596
        %v713 = vpack.c.b16 %v601, %v597
        %v714 = vpack.c.b16 %v602, %v598
        %v715 = vpack.c.b16 %v603, %v599
        %v716 = vpack.c.b16 %v608, %v604
        %v717 = vpack.c.b16 %v609, %v605
        %v718 = vpack.c.b16 %v610, %v606
        %v719 = vpack.c.b16 %v611, %v607
        %v720 = vpack.c.b16 %v616, %v612
        %v721 = vpack.c.b16 %v617, %v613
        %v722 = vpack.c.b16 %v618, %v614
        %v723 = vpack.c.b16 %v619, %v615
        %v724 = vpack.c.b16 %v624, %v620
        %v725 = vpack.c.b16 %v625, %v621
        %v726 = vpack.c.b16 %v626, %v622
        %v727 = vpack.c.b16 %v627, %v623
        %v728 = vpack.c.b16 %v632, %v628
        %v729 = vpack.c.b16 %v633, %v629
        %v730 = vpack.c.b16 %v634, %v630
        %v731 = vpack.c.b16 %v635, %v631
        %v732 = vpack.c.b16 %v640, %v636
        %v733 = vpack.c.b16 %v641, %v637
        %v734 = vpack.c.b16 %v642, %v638
        %v735 = vpack.c.b16 %v643, %v639
        %v736 = vpack.c.b16 %v648, %v644
        %v737 = vpack.c.b16 %v649, %v645
        %v738 = vpack.c.b16 %v650, %v646
        %v739 = vpack.c.b16 %v651, %v647
        %v740 = vpack.c.b16 %v656, %v652
        %v741 = vpack.c.b16 %v657, %v653
        %v742 = vpack.c.b16 %v658, %v654
        %v743 = vpack.c.b16 %v659, %v655
        %v744 = vpack.c.b16 %v664, %v660
        %v745 = vpack.c.b16 %v665, %v661
        %v746 = vpack.c.b16 %v666, %v662
        %v747 = vpack.c.b16 %v667, %v663
        %v748 = vpack.c.b16 %v672, %v668
        %v749 = vpack.c.b16 %v673, %v669
        %v750 = vpack.c.b16 %v674, %v670
        %v751 = vpack.c.b16 %v675, %v671
        %v752 = vpack.c.b16 %v680, %v676
        %v753 = vpack.c.b16 %v681, %v677
        %v754 = vpack.c.b16 %v682, %v678
        %v755 = vpack.c.b16 %v683, %v679
        %v756 = vpack.c.b16 %v688, %v684
        %v757 = vpack.c.b16 %v689, %v685
        %v758 = vpack.c.b16 %v690, %v686
        %v759 = vpack.c.b16 %v691, %v687
        %v760 = vpack.c.b16 %v696, %v692
        %v761 = vpack.c.b16 %v697, %v693
        %v762 = vpack.c.b16 %v698, %v694
        %v763 = vpack.c.b16 %v699, %v695
        %828 = vmatprep.subr.bf16.mxu0 %v701
        %829 = vmatpush1.bf16.msra.mxu0 %v700
        %830 = vmatprep.subr.bf16.mxu0 %v705
        %831 = vmatpush1.bf16.msra.mxu0 %v704
        %832 = vmatprep.subr.bf16.mxu0 %v709
        %833 = vmatpush1.bf16.msra.mxu0 %v708
        %834 = vmatprep.subr.bf16.mxu0 %v713
        %835 = vmatpush1.bf16.msra.mxu0 %v712
        %836 = vmatprep.subr.bf16.mxu0 %v717
        %837 = vmatpush1.bf16.msra.mxu0 %v716
        %838 = vmatprep.subr.bf16.mxu0 %v721
        %839 = vmatpush1.bf16.msra.mxu0 %v720
        %840 = vmatprep.subr.bf16.mxu0 %v725
        %841 = vmatpush1.bf16.msra.mxu0 %v724
        %842 = vmatprep.subr.bf16.mxu0 %v729
        %843 = vmatpush1.bf16.msra.mxu0 %v728
        %844 = vmatprep.subr.bf16.mxu0 %v733
        %845 = vmatpush1.bf16.msra.mxu0 %v732
        %846 = vmatprep.subr.bf16.mxu0 %v737
        %847 = vmatpush1.bf16.msra.mxu0 %v736
        %848 = vmatprep.subr.bf16.mxu0 %v741
        %849 = vmatpush1.bf16.msra.mxu0 %v740
        %850 = vmatprep.subr.bf16.mxu0 %v745
        %851 = vmatpush1.bf16.msra.mxu0 %v744
        %852 = vmatprep.subr.bf16.mxu0 %v749
        %853 = vmatpush1.bf16.msra.mxu0 %v748
        %854 = vmatprep.subr.bf16.mxu0 %v753
        %855 = vmatpush1.bf16.msra.mxu0 %v752
        %856 = vmatprep.subr.bf16.mxu0 %v757
        %857 = vmatpush1.bf16.msra.mxu0 %v756
        %858 = vmatprep.subr.bf16.mxu0 %v761
        %859 = vmatpush1.bf16.msra.mxu0 %v760
        %860 = vmatprep.mubr.bf16.mxu0 %v441
        %861 = vmatmul.mubr.bf16.gmra.mrb[0].mxu0 %v440
        %v862 = vpop.f32.mrb[0].mxu0
        %v863 = vadd.f32 0.0, %v862
        %v864 = vpop.f32.mrb[0].mxu0
        %v865 = vadd.f32 0.0, %v864
        %v866 = vpop.f32.mrb[0].mxu0
        %v867 = vadd.f32 0.0, %v866
        %v868 = vpop.f32.mrb[0].mxu0
        %v869 = vadd.f32 0.0, %v868
        %870 = vmatprep.mubr.bf16.mxu0 %v443
        %871 = vmatmul.mubr.bf16.gmra.mrb[0].mxu0 %v442
        %v872 = vpop.f32.mrb[0].mxu0
        %v873 = vadd.f32 0.0, %v872
        %v874 = vpop.f32.mrb[0].mxu0
        %v875 = vadd.f32 0.0, %v874
        %v876 = vpop.f32.mrb[0].mxu0
        %v877 = vadd.f32 0.0, %v876
        %v878 = vpop.f32.mrb[0].mxu0
        %v879 = vadd.f32 0.0, %v878
        %880 = vdwg.mxu0
        %881 = vmatprep.subr.bf16.mxu0 %v703
        %882 = vmatpush1.bf16.msra.mxu0 %v702
        %883 = vmatprep.subr.bf16.mxu0 %v707
        %884 = vmatpush1.bf16.msra.mxu0 %v706
        %885 = vmatprep.subr.bf16.mxu0 %v711
        %886 = vmatpush1.bf16.msra.mxu0 %v710
        %887 = vmatprep.subr.bf16.mxu0 %v715
        %888 = vmatpush1.bf16.msra.mxu0 %v714
        %889 = vmatprep.subr.bf16.mxu0 %v719
        %890 = vmatpush1.bf16.msra.mxu0 %v718
        %891 = vmatprep.subr.bf16.mxu0 %v723
        %892 = vmatpush1.bf16.msra.mxu0 %v722
        %893 = vmatprep.subr.bf16.mxu0 %v727
        %894 = vmatpush1.bf16.msra.mxu0 %v726
        %895 = vmatprep.subr.bf16.mxu0 %v731
        %896 = vmatpush1.bf16.msra.mxu0 %v730
        %897 = vmatprep.subr.bf16.mxu0 %v735
        %898 = vmatpush1.bf16.msra.mxu0 %v734
        %899 = vmatprep.subr.bf16.mxu0 %v739
        %900 = vmatpush1.bf16.msra.mxu0 %v738
        %901 = vmatprep.subr.bf16.mxu0 %v743
        %902 = vmatpush1.bf16.msra.mxu0 %v742
        %903 = vmatprep.subr.bf16.mxu0 %v747
        %904 = vmatpush1.bf16.msra.mxu0 %v746
        %905 = vmatprep.subr.bf16.mxu0 %v751
        %906 = vmatpush1.bf16.msra.mxu0 %v750
        %907 = vmatprep.subr.bf16.mxu0 %v755
        %908 = vmatpush1.bf16.msra.mxu0 %v754
        %909 = vmatprep.subr.bf16.mxu0 %v759
        %910 = vmatpush1.bf16.msra.mxu0 %v758
        %911 = vmatprep.subr.bf16.mxu0 %v763
        %912 = vmatpush1.bf16.msra.mxu0 %v762
        %913 = vmatprep.mubr.bf16.mxu0 %v441
        %914 = vmatmul.mubr.bf16.gmra.mrb[0].mxu0 %v440
        %v915 = vpop.f32.mrb[0].mxu0
        %v916 = vadd.f32 0.0, %v915
        %v917 = vpop.f32.mrb[0].mxu0
        %v918 = vadd.f32 0.0, %v917
        %v919 = vpop.f32.mrb[0].mxu0
        %v920 = vadd.f32 0.0, %v919
        %v921 = vpop.f32.mrb[0].mxu0
        %v922 = vadd.f32 0.0, %v921
        %923 = vmatprep.mubr.bf16.mxu0 %v443
        %924 = vmatmul.mubr.bf16.gmra.mrb[0].mxu0 %v442
        %v925 = vpop.f32.mrb[0].mxu0
        %v926 = vadd.f32 0.0, %v925
        %v927 = vpop.f32.mrb[0].mxu0
        %v928 = vadd.f32 0.0, %v927
        %v929 = vpop.f32.mrb[0].mxu0
        %v930 = vadd.f32 0.0, %v929
        %v931 = vpop.f32.mrb[0].mxu0
        %v932 = vadd.f32 0.0, %v931
        %933 = vdwg.mxu0
        %v934 = vpack.c.bf16 %v437, %v436
        %v935 = vpack.c.bf16 %v439, %v438
        %v936 = vld [vmem:[%s3] sm:$0xff]
        %v937 = vld [vmem:[%s3 + $0x8] sm:$0xf]
        %v938 = vld [vmem:[%s3 + $0xc] sm:$0xff]
        %v939 = vld [vmem:[%s3 + $0x14] sm:$0xf]
        %v940 = vld [vmem:[%s3 + $0x18] sm:$0xff]
        %v941 = vld [vmem:[%s3 + $0x20] sm:$0xf]
        %v942 = vld [vmem:[%s3 + $0x24] sm:$0xff]
        %v943 = vld [vmem:[%s3 + $0x2c] sm:$0xf]
        %v952 = vunpack.c.l.b16 %v936
        %v953 = vunpack.c.h.b16 %v936
        %v954 = vunpack.c.l.b16 %v937
        %v955 = vunpack.c.l.b16 %v938
        %v956 = vunpack.c.h.b16 %v938
        %v957 = vunpack.c.l.b16 %v939
        %v958 = vunpack.c.l.b16 %v940
        %v959 = vunpack.c.h.b16 %v940
        %v960 = vunpack.c.l.b16 %v941
        %v961 = vunpack.c.l.b16 %v942
        %v962 = vunpack.c.h.b16 %v942
        %v963 = vunpack.c.l.b16 %v943
        %v964 = vpack.c.b16 %v955, %v952
        %v965 = vpack.c.b16 %v956, %v953
        %v966 = vpack.c.b16 %v957, %v954
        %v967 = vpack.c.b16 %v961, %v958
        %v968 = vpack.c.b16 %v962, %v959
        %v969 = vpack.c.b16 %v963, %v960
        %vm976 = vcmask 261120
        %v978 = vsel %vm976, %v934, 0
        %v981 = vsel %vm976, %v935, 0
        %983 = vmatprep.subr.bf16.mxu0 %v965
        %984 = vmatpush1.bf16.msra.mxu0 %v964
        %985 = vmatprep.subr.bf16.mxu0 %v968
        %986 = vmatpush1.bf16.msra.mxu0 %v967
        %987 = vmatprep.subr.bf16.mxu0 0
        %988 = vmatpush1.bf16.msra.mxu0 0
        %989 = vmatprep.subr.bf16.mxu0 0
        %990 = vmatpush1.bf16.msra.mxu0 0
        %991 = vmatprep.subr.bf16.mxu0 0
        %992 = vmatpush1.bf16.msra.mxu0 0
        %993 = vmatprep.subr.bf16.mxu0 0
        %994 = vmatpush1.bf16.msra.mxu0 0
        %995 = vmatprep.subr.bf16.mxu0 0
        %996 = vmatpush1.bf16.msra.mxu0 0
        %997 = vmatprep.subr.bf16.mxu0 0
        %998 = vmatpush1.bf16.msra.mxu0 0
        %999 = vmatprep.subr.bf16.mxu0 0
        %1000 = vmatpush1.bf16.msra.mxu0 0
        %1001 = vmatprep.subr.bf16.mxu0 0
        %1002 = vmatpush1.bf16.msra.mxu0 0
        %1003 = vmatprep.subr.bf16.mxu0 0
        %1004 = vmatpush1.bf16.msra.mxu0 0
        %1005 = vmatprep.subr.bf16.mxu0 0
        %1006 = vmatpush1.bf16.msra.mxu0 0
        %1007 = vmatprep.subr.bf16.mxu0 0
        %1008 = vmatpush1.bf16.msra.mxu0 0
        %1009 = vmatprep.subr.bf16.mxu0 0
        %1010 = vmatpush1.bf16.msra.mxu0 0
        %1011 = vmatprep.subr.bf16.mxu0 0
        %1012 = vmatpush1.bf16.msra.mxu0 0
        %1013 = vmatprep.subr.bf16.mxu0 0
        %1014 = vmatpush1.bf16.msra.mxu0 0
        %1015 = vmatprep.mubr.bf16.mxu0 0
        %1016 = vmatmul.mubr.bf16.gmra.mrb[0].mxu0 %v978
        %v1017 = vpop.f32.mrb[0].mxu0
        %v1018 = vadd.f32 0.0, %v1017
        %v1019 = vpop.f32.mrb[0].mxu0
        %v1020 = vadd.f32 0.0, %v1019
        %v1021 = vpop.f32.mrb[0].mxu0
        %v1022 = vadd.f32 0.0, %v1021
        %v1023 = vpop.f32.mrb[0].mxu0
        %v1024 = vadd.f32 0.0, %v1023
        %1025 = vmatprep.mubr.bf16.mxu0 0
        %1026 = vmatmul.mubr.bf16.gmra.mrb[0].mxu0 %v981
        %v1027 = vpop.f32.mrb[0].mxu0
        %v1028 = vadd.f32 0.0, %v1027
        %v1029 = vpop.f32.mrb[0].mxu0
        %v1030 = vadd.f32 0.0, %v1029
        %v1031 = vpop.f32.mrb[0].mxu0
        %v1032 = vadd.f32 0.0, %v1031
        %v1033 = vpop.f32.mrb[0].mxu0
        %v1034 = vadd.f32 0.0, %v1033
        %1035 = vdwg.mxu0
        %1036 = vmatprep.subr.bf16.mxu0 0
        %1037 = vmatpush1.bf16.msra.mxu0 %v966
        %1038 = vmatprep.subr.bf16.mxu0 0
        %1039 = vmatpush1.bf16.msra.mxu0 %v969
        %1040 = vmatprep.subr.bf16.mxu0 0
        %1041 = vmatpush1.bf16.msra.mxu0 0
        %1042 = vmatprep.subr.bf16.mxu0 0
        %1043 = vmatpush1.bf16.msra.mxu0 0
        %1044 = vmatprep.subr.bf16.mxu0 0
        %1045 = vmatpush1.bf16.msra.mxu0 0
        %1046 = vmatprep.subr.bf16.mxu0 0
        %1047 = vmatpush1.bf16.msra.mxu0 0
        %1048 = vmatprep.subr.bf16.mxu0 0
        %1049 = vmatpush1.bf16.msra.mxu0 0
        %1050 = vmatprep.subr.bf16.mxu0 0
        %1051 = vmatpush1.bf16.msra.mxu0 0
        %1052 = vmatprep.subr.bf16.mxu0 0
        %1053 = vmatpush1.bf16.msra.mxu0 0
        %1054 = vmatprep.subr.bf16.mxu0 0
        %1055 = vmatpush1.bf16.msra.mxu0 0
        %1056 = vmatprep.subr.bf16.mxu0 0
        %1057 = vmatpush1.bf16.msra.mxu0 0
        %1058 = vmatprep.subr.bf16.mxu0 0
        %1059 = vmatpush1.bf16.msra.mxu0 0
        %1060 = vmatprep.subr.bf16.mxu0 0
        %1061 = vmatpush1.bf16.msra.mxu0 0
        %1062 = vmatprep.subr.bf16.mxu0 0
        %1063 = vmatpush1.bf16.msra.mxu0 0
        %1064 = vmatprep.subr.bf16.mxu0 0
        %1065 = vmatpush1.bf16.msra.mxu0 0
        %1066 = vmatprep.subr.bf16.mxu0 0
        %1067 = vmatpush1.bf16.msra.mxu0 0
        %1068 = vmatprep.mubr.bf16.mxu0 0
        %1069 = vmatmul.mubr.bf16.gmra.mrb[0].mxu0 %v978
        %v1070 = vpop.f32.mrb[0].mxu0
        %v1071 = vadd.f32 0.0, %v1070
        %v1072 = vpop.f32.mrb[0].mxu0
        %v1073 = vpop.f32.mrb[0].mxu0
        %v1074 = vadd.f32 0.0, %v1073
        %v1075 = vpop.f32.mrb[0].mxu0
        %1076 = vmatprep.mubr.bf16.mxu0 0
        %1077 = vmatmul.mubr.bf16.gmra.mrb[0].mxu0 %v981
        %v1078 = vpop.f32.mrb[0].mxu0
        %v1079 = vadd.f32 0.0, %v1078
        %v1080 = vpop.f32.mrb[0].mxu0
        %v1081 = vpop.f32.mrb[0].mxu0
        %v1082 = vadd.f32 0.0, %v1081
        %v1083 = vpop.f32.mrb[0].mxu0
        %1084 = vdwg.mxu0
        %v1085 = vadd.f32 %v863, %v1018
        %v1086 = vadd.f32 %v865, %v1020
        %v1087 = vadd.f32 %v867, %v1022
        %v1088 = vadd.f32 %v869, %v1024
        %v1089 = vadd.f32 %v873, %v1028
        %v1090 = vadd.f32 %v875, %v1030
        %v1091 = vadd.f32 %v877, %v1032
        %v1092 = vadd.f32 %v879, %v1034
        %v1093 = vld [vmem:[%s7] sm:$0x3]
        %v1095 = vlaneseq
        %v1096 = vshrl.u32 %v1095, 7
        %v1097 = vsub.s32 0, %v1096
        %v1098 = vrot.slane %v1093, %v1097
        %v1099 = vlaneseq
        %v1100 = vshrl.u32 %v1099, 7
        %v1101 = vsub.s32 1, %v1100
        %v1102 = vrot.slane %v1093, %v1101
        %v1105 = vadd.f32 %v1085, %v1098
        %v1106 = vadd.f32 %v1086, %v1102
        %v1107 = vadd.f32 %v1087, %v1098
        %v1108 = vadd.f32 %v1088, %v1102
        %v1109 = vadd.f32 %v1089, %v1098
        %v1110 = vadd.f32 %v1090, %v1102
        %v1111 = vadd.f32 %v1091, %v1098
        %v1112 = vadd.f32 %v1092, %v1102
        %v1113 = vmax.f32 %v1105, 0.0
        %v1114 = vmax.f32 %v1106, 0.0
        %v1115 = vmax.f32 %v1107, 0.0
        %v1116 = vmax.f32 %v1108, 0.0
        %v1117 = vmax.f32 %v1109, 0.0
        %v1118 = vmax.f32 %v1110, 0.0
        %v1119 = vmax.f32 %v1111, 0.0
        %v1120 = vmax.f32 %v1112, 0.0
        %v1121 = vpack.c.bf16 %v1115, %v1113
        %v1122 = vpack.c.bf16 %v1116, %v1114
        %v1123 = vpack.c.bf16 %v1119, %v1117
        %v1124 = vpack.c.bf16 %v1120, %v1118
        %v1125 = vld [vmem:[%s4] sm:$0xf]
        %v1126 = vld [vmem:[%s4 + $0x4] sm:$0xf]
        %v1127 = vld [vmem:[%s4 + $0x8] sm:$0xf]
        %v1128 = vld [vmem:[%s4 + $0xc] sm:$0xf]
        %v1129 = vld [vmem:[%s4 + $0x10] sm:$0xf]
        %v1130 = vld [vmem:[%s4 + $0x14] sm:$0xf]
        %v1131 = vld [vmem:[%s4 + $0x18] sm:$0xf]
        %v1132 = vld [vmem:[%s4 + $0x1c] sm:$0xf]
        %v1133 = vld [vmem:[%s4 + $0x20] sm:$0xf]
        %v1134 = vld [vmem:[%s4 + $0x24] sm:$0xf]
        %v1135 = vld [vmem:[%s4 + $0x28] sm:$0xf]
        %v1136 = vld [vmem:[%s4 + $0x2c] sm:$0xf]
        %v1137 = vld [vmem:[%s4 + $0x30] sm:$0xf]
        %v1138 = vld [vmem:[%s4 + $0x34] sm:$0xf]
        %v1139 = vld [vmem:[%s4 + $0x38] sm:$0xf]
        %v1140 = vld [vmem:[%s4 + $0x3c] sm:$0xf]
        %v1141 = vld [vmem:[%s4 + $0x40] sm:$0xf]
        %v1142 = vld [vmem:[%s4 + $0x44] sm:$0xf]
        %v1143 = vld [vmem:[%s4 + $0x48] sm:$0xf]
        %v1144 = vld [vmem:[%s4 + $0x4c] sm:$0xf]
        %v1145 = vld [vmem:[%s4 + $0x50] sm:$0xf]
        %v1146 = vld [vmem:[%s4 + $0x54] sm:$0xf]
        %v1147 = vld [vmem:[%s4 + $0x58] sm:$0xf]
        %v1148 = vld [vmem:[%s4 + $0x5c] sm:$0xf]
        %v1149 = vld [vmem:[%s4 + $0x60] sm:$0xf]
        %v1150 = vld [vmem:[%s4 + $0x64] sm:$0xf]
        %v1151 = vld [vmem:[%s4 + $0x68] sm:$0xf]
        %v1152 = vld [vmem:[%s4 + $0x6c] sm:$0xf]
        %v1153 = vld [vmem:[%s4 + $0x70] sm:$0xf]
        %v1154 = vld [vmem:[%s4 + $0x74] sm:$0xf]
        %v1155 = vld [vmem:[%s4 + $0x78] sm:$0xf]
        %v1156 = vld [vmem:[%s4 + $0x7c] sm:$0xf]
        %v1189 = vunpack.c.l.b16 %v1125
        %v1190 = vunpack.c.l.b16 %v1126
        %v1191 = vunpack.c.l.b16 %v1127
        %v1192 = vunpack.c.l.b16 %v1128
        %v1193 = vunpack.c.l.b16 %v1129
        %v1194 = vunpack.c.l.b16 %v1130
        %v1195 = vunpack.c.l.b16 %v1131
        %v1196 = vunpack.c.l.b16 %v1132
        %v1197 = vunpack.c.l.b16 %v1133
        %v1198 = vunpack.c.l.b16 %v1134
        %v1199 = vunpack.c.l.b16 %v1135
        %v1200 = vunpack.c.l.b16 %v1136
        %v1201 = vunpack.c.l.b16 %v1137
        %v1202 = vunpack.c.l.b16 %v1138
        %v1203 = vunpack.c.l.b16 %v1139
        %v1204 = vunpack.c.l.b16 %v1140
        %v1205 = vunpack.c.l.b16 %v1141
        %v1206 = vunpack.c.l.b16 %v1142
        %v1207 = vunpack.c.l.b16 %v1143
        %v1208 = vunpack.c.l.b16 %v1144
        %v1209 = vunpack.c.l.b16 %v1145
        %v1210 = vunpack.c.l.b16 %v1146
        %v1211 = vunpack.c.l.b16 %v1147
        %v1212 = vunpack.c.l.b16 %v1148
        %v1213 = vunpack.c.l.b16 %v1149
        %v1214 = vunpack.c.l.b16 %v1150
        %v1215 = vunpack.c.l.b16 %v1151
        %v1216 = vunpack.c.l.b16 %v1152
        %v1217 = vunpack.c.l.b16 %v1153
        %v1218 = vunpack.c.l.b16 %v1154
        %v1219 = vunpack.c.l.b16 %v1155
        %v1220 = vunpack.c.l.b16 %v1156
        %v1221 = vpack.c.b16 %v1190, %v1189
        %v1222 = vpack.c.b16 %v1192, %v1191
        %v1223 = vpack.c.b16 %v1194, %v1193
        %v1224 = vpack.c.b16 %v1196, %v1195
        %v1225 = vpack.c.b16 %v1198, %v1197
        %v1226 = vpack.c.b16 %v1200, %v1199
        %v1227 = vpack.c.b16 %v1202, %v1201
        %v1228 = vpack.c.b16 %v1204, %v1203
        %v1229 = vpack.c.b16 %v1206, %v1205
        %v1230 = vpack.c.b16 %v1208, %v1207
        %v1231 = vpack.c.b16 %v1210, %v1209
        %v1232 = vpack.c.b16 %v1212, %v1211
        %v1233 = vpack.c.b16 %v1214, %v1213
        %v1234 = vpack.c.b16 %v1216, %v1215
        %v1235 = vpack.c.b16 %v1218, %v1217
        %v1236 = vpack.c.b16 %v1220, %v1219
        %1253 = vmatprep.subr.bf16.mxu0 0
        %1254 = vmatpush1.bf16.msra.mxu0 %v1221
        %1255 = vmatprep.subr.bf16.mxu0 0
        %1256 = vmatpush1.bf16.msra.mxu0 %v1222
        %1257 = vmatprep.subr.bf16.mxu0 0
        %1258 = vmatpush1.bf16.msra.mxu0 %v1223
        %1259 = vmatprep.subr.bf16.mxu0 0
        %1260 = vmatpush1.bf16.msra.mxu0 %v1224
        %1261 = vmatprep.subr.bf16.mxu0 0
        %1262 = vmatpush1.bf16.msra.mxu0 %v1225
        %1263 = vmatprep.subr.bf16.mxu0 0
        %1264 = vmatpush1.bf16.msra.mxu0 %v1226
        %1265 = vmatprep.subr.bf16.mxu0 0
        %1266 = vmatpush1.bf16.msra.mxu0 %v1227
        %1267 = vmatprep.subr.bf16.mxu0 0
        %1268 = vmatpush1.bf16.msra.mxu0 %v1228
        %1269 = vmatprep.subr.bf16.mxu0 0
        %1270 = vmatpush1.bf16.msra.mxu0 %v1229
        %1271 = vmatprep.subr.bf16.mxu0 0
        %1272 = vmatpush1.bf16.msra.mxu0 %v1230
        %1273 = vmatprep.subr.bf16.mxu0 0
        %1274 = vmatpush1.bf16.msra.mxu0 %v1231
        %1275 = vmatprep.subr.bf16.mxu0 0
        %1276 = vmatpush1.bf16.msra.mxu0 %v1232
        %1277 = vmatprep.subr.bf16.mxu0 0
        %1278 = vmatpush1.bf16.msra.mxu0 %v1233
        %1279 = vmatprep.subr.bf16.mxu0 0
        %1280 = vmatpush1.bf16.msra.mxu0 %v1234
        %1281 = vmatprep.subr.bf16.mxu0 0
        %1282 = vmatpush1.bf16.msra.mxu0 %v1235
        %1283 = vmatprep.subr.bf16.mxu0 0
        %1284 = vmatpush1.bf16.msra.mxu0 %v1236
        %1285 = vmatprep.mubr.bf16.mxu0 %v1122
        %1286 = vmatmul.mubr.bf16.gmra.mrb[0].mxu0 %v1121
        %v1287 = vpop.f32.mrb[0].mxu0
        %v1288 = vadd.f32 0.0, %v1287
        %v1289 = vpop.f32.mrb[0].mxu0
        %v1290 = vpop.f32.mrb[0].mxu0
        %v1291 = vadd.f32 0.0, %v1290
        %v1292 = vpop.f32.mrb[0].mxu0
        %1293 = vmatprep.mubr.bf16.mxu0 %v1124
        %1294 = vmatmul.mubr.bf16.gmra.mrb[0].mxu0 %v1123
        %v1295 = vpop.f32.mrb[0].mxu0
        %v1296 = vadd.f32 0.0, %v1295
        %v1297 = vpop.f32.mrb[0].mxu0
        %v1298 = vpop.f32.mrb[0].mxu0
        %v1299 = vadd.f32 0.0, %v1298
        %v1300 = vpop.f32.mrb[0].mxu0
        %1301 = vdwg.mxu0
        %vm1302 = vcmask 64512
        %v1303 = vsel %vm1302, %v1288, -inf
        %1304 = vmax.xlane.f32.xlu0 %v1303
        %v1305 = vpop.xlane.xlu0 %1304
        %v1306 = vsel %vm1302, %v1291, -inf
        %1307 = vmax.xlane.f32.xlu0 %v1306
        %v1308 = vpop.xlane.xlu0 %1307
        %v1309 = vsel %vm1302, %v1296, -inf
        %1310 = vmax.xlane.f32.xlu0 %v1309
        %v1311 = vpop.xlane.xlu0 %1310
        %v1312 = vsel %vm1302, %v1299, -inf
        %1313 = vmax.xlane.f32.xlu0 %v1312
        %v1314 = vpop.xlane.xlu0 %1313
        %v1315 = vsub.f32 %v1288, %v1305
        %v1316 = vsub.f32 %v1291, %v1308
        %v1317 = vsub.f32 %v1296, %v1311
        %v1318 = vsub.f32 %v1299, %v1314
        %v1319 = vmul.f32 %v1315, 1.442695
        %v1320 = vpow.pop %v1319
        %v1321 = vmul.f32 %v1316, 1.442695
        %v1322 = vpow.pop %v1321
        %v1323 = vmul.f32 %v1317, 1.442695
        %v1324 = vpow.pop %v1323
        %v1325 = vmul.f32 %v1318, 1.442695
        %v1326 = vpow.pop %v1325
        %v1327 = vsel %vm1302, %v1320, 0.0
        %1328 = vadd.xlane.f32.xlu0 %v1327
        %v1329 = vpop.xlane.xlu0 %1328
        %v1330 = vsel %vm1302, %v1322, 0.0
        %1331 = vadd.xlane.f32.xlu0 %v1330
        %v1332 = vpop.xlane.xlu0 %1331
        %v1333 = vsel %vm1302, %v1324, 0.0
        %1334 = vadd.xlane.f32.xlu0 %v1333
        %v1335 = vpop.xlane.xlu0 %1334
        %v1336 = vsel %vm1302, %v1326, 0.0
        %1337 = vadd.xlane.f32.xlu0 %v1336
        %v1338 = vpop.xlane.xlu0 %1337
        %v1339 = vrcp.pop %v1329
        %v1340 = vrcp.pop %v1332
        %v1341 = vrcp.pop %v1335
        %v1342 = vrcp.pop %v1338
        %v1343 = vmul.f32 %v1320, %v1339
        %v1344 = vmul.f32 %v1322, %v1340
        %v1345 = vmul.f32 %v1324, %v1341
        %v1346 = vmul.f32 %v1326, %v1342
        %v1347 = vpack.c.bf16 %v1344, %v1343
        %v1348 = vpack.c.bf16 %v1346, %v1345
        %v1349 = vld [vmem:[%s5] sm:$0xff]
        %v1351 = vunpack.c.l.b16 %v1349
        %v1352 = vunpack.c.h.b16 %v1349
        %v1353 = vpack.c.b16 %v1351, %v1351
        %v1354 = vpack.c.b16 %v1352, %v1352
        %v1356 = vsel %vm1302, %v1347, 0
        %v1359 = vsel %vm1302, %v1348, 0
        %vm1361 = vcmask 1043456
        %v1363 = vsel %vm1361, %v1353, 0
        %v1366 = vsel %vm1361, %v1354, 0
        %1368 = vmatprep.subr.bf16.mxu0 %v1366
        %1369 = vmatpush1.bf16.msra.mxu0 %v1363
        %1370 = vmatprep.subr.bf16.mxu0 0
        %1371 = vmatpush1.bf16.msra.mxu0 0
        %1372 = vmatprep.subr.bf16.mxu0 0
        %1373 = vmatpush1.bf16.msra.mxu0 0
        %1374 = vmatprep.subr.bf16.mxu0 0
        %1375 = vmatpush1.bf16.msra.mxu0 0
        %1376 = vmatprep.subr.bf16.mxu0 0
        %1377 = vmatpush1.bf16.msra.mxu0 0
        %1378 = vmatprep.subr.bf16.mxu0 0
        %1379 = vmatpush1.bf16.msra.mxu0 0
        %1380 = vmatprep.subr.bf16.mxu0 0
        %1381 = vmatpush1.bf16.msra.mxu0 0
        %1382 = vmatprep.subr.bf16.mxu0 0
        %1383 = vmatpush1.bf16.msra.mxu0 0
        %1384 = vmatprep.subr.bf16.mxu0 0
        %1385 = vmatpush1.bf16.msra.mxu0 0
        %1386 = vmatprep.subr.bf16.mxu0 0
        %1387 = vmatpush1.bf16.msra.mxu0 0
        %1388 = vmatprep.subr.bf16.mxu0 0
        %1389 = vmatpush1.bf16.msra.mxu0 0
        %1390 = vmatprep.subr.bf16.mxu0 0
        %1391 = vmatpush1.bf16.msra.mxu0 0
        %1392 = vmatprep.subr.bf16.mxu0 0
        %1393 = vmatpush1.bf16.msra.mxu0 0
        %1394 = vmatprep.subr.bf16.mxu0 0
        %1395 = vmatpush1.bf16.msra.mxu0 0
        %1396 = vmatprep.subr.bf16.mxu0 0
        %1397 = vmatpush1.bf16.msra.mxu0 0
        %1398 = vmatprep.subr.bf16.mxu0 0
        %1399 = vmatpush1.bf16.msra.mxu0 0
        %1400 = vmatprep.mubr.bf16.mxu0 0
        %1401 = vmatmul.mubr.bf16.gmra.mrb[0].mxu0 %v1356
        %v1402 = vpop.f32.mrb[0].mxu0
        %v1403 = vadd.f32 0.0, %v1402
        %v1404 = vpop.f32.mrb[0].mxu0
        %v1405 = vadd.f32 0.0, %v1404
        %v1406 = vpop.f32.mrb[0].mxu0
        %v1407 = vadd.f32 0.0, %v1406
        %v1408 = vpop.f32.mrb[0].mxu0
        %v1409 = vadd.f32 0.0, %v1408
        %1410 = vmatprep.mubr.bf16.mxu0 0
        %1411 = vmatmul.mubr.bf16.gmra.mrb[0].mxu0 %v1359
        %v1412 = vpop.f32.mrb[0].mxu0
        %v1413 = vadd.f32 0.0, %v1412
        %v1414 = vpop.f32.mrb[0].mxu0
        %v1415 = vadd.f32 0.0, %v1414
        %v1416 = vpop.f32.mrb[0].mxu0
        %v1417 = vadd.f32 0.0, %v1416
        %v1418 = vpop.f32.mrb[0].mxu0
        %v1419 = vadd.f32 0.0, %v1418
        %1420 = vdwg.mxu0
        %v1421 = vmul.f32 %v1403, %v1113
        %v1422 = vmul.f32 %v1405, %v1114
        %v1423 = vmul.f32 %v1407, %v1115
        %v1424 = vmul.f32 %v1409, %v1116
        %v1425 = vmul.f32 %v1413, %v1117
        %v1426 = vmul.f32 %v1415, %v1118
        %v1427 = vmul.f32 %v1417, %v1119
        %v1428 = vmul.f32 %v1419, %v1120
        %v1429 = vpack.c.bf16 %v1423, %v1421
        %v1430 = vpack.c.bf16 %v1424, %v1422
        %v1431 = vpack.c.bf16 %v1427, %v1425
        %v1432 = vpack.c.bf16 %v1428, %v1426
        %v1433 = vld [vmem:[%s6] sm:$0xff]
        %v1434 = vld [vmem:[%s6 + $0x8] sm:$0xf]
        %v1435 = vld [vmem:[%s6 + $0xc] sm:$0xff]
        %v1436 = vld [vmem:[%s6 + $0x14] sm:$0xf]
        %v1437 = vld [vmem:[%s6 + $0x18] sm:$0xff]
        %v1438 = vld [vmem:[%s6 + $0x20] sm:$0xf]
        %v1439 = vld [vmem:[%s6 + $0x24] sm:$0xff]
        %v1440 = vld [vmem:[%s6 + $0x2c] sm:$0xf]
        %v1441 = vld [vmem:[%s6 + $0x30] sm:$0xff]
        %v1442 = vld [vmem:[%s6 + $0x38] sm:$0xf]
        %v1443 = vld [vmem:[%s6 + $0x3c] sm:$0xff]
        %v1444 = vld [vmem:[%s6 + $0x44] sm:$0xf]
        %v1445 = vld [vmem:[%s6 + $0x48] sm:$0xff]
        %v1446 = vld [vmem:[%s6 + $0x50] sm:$0xf]
        %v1447 = vld [vmem:[%s6 + $0x54] sm:$0xff]
        %v1448 = vld [vmem:[%s6 + $0x5c] sm:$0xf]
        %v1449 = vld [vmem:[%s6 + $0x60] sm:$0xff]
        %v1450 = vld [vmem:[%s6 + $0x68] sm:$0xf]
        %v1451 = vld [vmem:[%s6 + $0x6c] sm:$0xff]
        %v1452 = vld [vmem:[%s6 + $0x74] sm:$0xf]
        %v1453 = vld [vmem:[%s6 + $0x78] sm:$0xff]
        %v1454 = vld [vmem:[%s6 + $0x80] sm:$0xf]
        %v1455 = vld [vmem:[%s6 + $0x84] sm:$0xff]
        %v1456 = vld [vmem:[%s6 + $0x8c] sm:$0xf]
        %v1457 = vld [vmem:[%s6 + $0x90] sm:$0xff]
        %v1458 = vld [vmem:[%s6 + $0x98] sm:$0xf]
        %v1459 = vld [vmem:[%s6 + $0x9c] sm:$0xff]
        %v1460 = vld [vmem:[%s6 + $0xa4] sm:$0xf]
        %v1461 = vld [vmem:[%s6 + $0xa8] sm:$0xff]
        %v1462 = vld [vmem:[%s6 + $0xb0] sm:$0xf]
        %v1463 = vld [vmem:[%s6 + $0xb4] sm:$0xff]
        %v1464 = vld [vmem:[%s6 + $0xbc] sm:$0xf]
        %v1465 = vld [vmem:[%s6 + $0xc0] sm:$0xff]
        %v1466 = vld [vmem:[%s6 + $0xc8] sm:$0xf]
        %v1467 = vld [vmem:[%s6 + $0xcc] sm:$0xff]
        %v1468 = vld [vmem:[%s6 + $0xd4] sm:$0xf]
        %v1469 = vld [vmem:[%s6 + $0xd8] sm:$0xff]
        %v1470 = vld [vmem:[%s6 + $0xe0] sm:$0xf]
        %v1471 = vld [vmem:[%s6 + $0xe4] sm:$0xff]
        %v1472 = vld [vmem:[%s6 + $0xec] sm:$0xf]
        %v1473 = vld [vmem:[%s6 + $0xf0] sm:$0xff]
        %v1474 = vld [vmem:[%s6 + $0xf8] sm:$0xf]
        %v1475 = vld [vmem:[%s6 + $0xfc] sm:$0xff]
        %v1476 = vld [vmem:[%s6 + $0x104] sm:$0xf]
        %v1477 = vld [vmem:[%s6 + $0x108] sm:$0xff]
        %v1478 = vld [vmem:[%s6 + $0x110] sm:$0xf]
        %v1479 = vld [vmem:[%s6 + $0x114] sm:$0xff]
        %v1480 = vld [vmem:[%s6 + $0x11c] sm:$0xf]
        %v1481 = vld [vmem:[%s6 + $0x120] sm:$0xff]
        %v1482 = vld [vmem:[%s6 + $0x128] sm:$0xf]
        %v1483 = vld [vmem:[%s6 + $0x12c] sm:$0xff]
        %v1484 = vld [vmem:[%s6 + $0x134] sm:$0xf]
        %v1485 = vld [vmem:[%s6 + $0x138] sm:$0xff]
        %v1486 = vld [vmem:[%s6 + $0x140] sm:$0xf]
        %v1487 = vld [vmem:[%s6 + $0x144] sm:$0xff]
        %v1488 = vld [vmem:[%s6 + $0x14c] sm:$0xf]
        %v1489 = vld [vmem:[%s6 + $0x150] sm:$0xff]
        %v1490 = vld [vmem:[%s6 + $0x158] sm:$0xf]
        %v1491 = vld [vmem:[%s6 + $0x15c] sm:$0xff]
        %v1492 = vld [vmem:[%s6 + $0x164] sm:$0xf]
        %v1493 = vld [vmem:[%s6 + $0x168] sm:$0xff]
        %v1494 = vld [vmem:[%s6 + $0x170] sm:$0xf]
        %v1495 = vld [vmem:[%s6 + $0x174] sm:$0xff]
        %v1496 = vld [vmem:[%s6 + $0x17c] sm:$0xf]
        %v1561 = vunpack.c.l.b16 %v1433
        %v1562 = vunpack.c.h.b16 %v1433
        %v1563 = vunpack.c.l.b16 %v1434
        %v1564 = vunpack.c.l.b16 %v1435
        %v1565 = vunpack.c.h.b16 %v1435
        %v1566 = vunpack.c.l.b16 %v1436
        %v1567 = vunpack.c.l.b16 %v1437
        %v1568 = vunpack.c.h.b16 %v1437
        %v1569 = vunpack.c.l.b16 %v1438
        %v1570 = vunpack.c.l.b16 %v1439
        %v1571 = vunpack.c.h.b16 %v1439
        %v1572 = vunpack.c.l.b16 %v1440
        %v1573 = vunpack.c.l.b16 %v1441
        %v1574 = vunpack.c.h.b16 %v1441
        %v1575 = vunpack.c.l.b16 %v1442
        %v1576 = vunpack.c.l.b16 %v1443
        %v1577 = vunpack.c.h.b16 %v1443
        %v1578 = vunpack.c.l.b16 %v1444
        %v1579 = vunpack.c.l.b16 %v1445
        %v1580 = vunpack.c.h.b16 %v1445
        %v1581 = vunpack.c.l.b16 %v1446
        %v1582 = vunpack.c.l.b16 %v1447
        %v1583 = vunpack.c.h.b16 %v1447
        %v1584 = vunpack.c.l.b16 %v1448
        %v1585 = vunpack.c.l.b16 %v1449
        %v1586 = vunpack.c.h.b16 %v1449
        %v1587 = vunpack.c.l.b16 %v1450
        %v1588 = vunpack.c.l.b16 %v1451
        %v1589 = vunpack.c.h.b16 %v1451
        %v1590 = vunpack.c.l.b16 %v1452
        %v1591 = vunpack.c.l.b16 %v1453
        %v1592 = vunpack.c.h.b16 %v1453
        %v1593 = vunpack.c.l.b16 %v1454
        %v1594 = vunpack.c.l.b16 %v1455
        %v1595 = vunpack.c.h.b16 %v1455
        %v1596 = vunpack.c.l.b16 %v1456
        %v1597 = vunpack.c.l.b16 %v1457
        %v1598 = vunpack.c.h.b16 %v1457
        %v1599 = vunpack.c.l.b16 %v1458
        %v1600 = vunpack.c.l.b16 %v1459
        %v1601 = vunpack.c.h.b16 %v1459
        %v1602 = vunpack.c.l.b16 %v1460
        %v1603 = vunpack.c.l.b16 %v1461
        %v1604 = vunpack.c.h.b16 %v1461
        %v1605 = vunpack.c.l.b16 %v1462
        %v1606 = vunpack.c.l.b16 %v1463
        %v1607 = vunpack.c.h.b16 %v1463
        %v1608 = vunpack.c.l.b16 %v1464
        %v1609 = vunpack.c.l.b16 %v1465
        %v1610 = vunpack.c.h.b16 %v1465
        %v1611 = vunpack.c.l.b16 %v1466
        %v1612 = vunpack.c.l.b16 %v1467
        %v1613 = vunpack.c.h.b16 %v1467
        %v1614 = vunpack.c.l.b16 %v1468
        %v1615 = vunpack.c.l.b16 %v1469
        %v1616 = vunpack.c.h.b16 %v1469
        %v1617 = vunpack.c.l.b16 %v1470
        %v1618 = vunpack.c.l.b16 %v1471
        %v1619 = vunpack.c.h.b16 %v1471
        %v1620 = vunpack.c.l.b16 %v1472
        %v1621 = vunpack.c.l.b16 %v1473
        %v1622 = vunpack.c.h.b16 %v1473
        %v1623 = vunpack.c.l.b16 %v1474
        %v1624 = vunpack.c.l.b16 %v1475
        %v1625 = vunpack.c.h.b16 %v1475
        %v1626 = vunpack.c.l.b16 %v1476
        %v1627 = vunpack.c.l.b16 %v1477
        %v1628 = vunpack.c.h.b16 %v1477
        %v1629 = vunpack.c.l.b16 %v1478
        %v1630 = vunpack.c.l.b16 %v1479
        %v1631 = vunpack.c.h.b16 %v1479
        %v1632 = vunpack.c.l.b16 %v1480
        %v1633 = vunpack.c.l.b16 %v1481
        %v1634 = vunpack.c.h.b16 %v1481
        %v1635 = vunpack.c.l.b16 %v1482
        %v1636 = vunpack.c.l.b16 %v1483
        %v1637 = vunpack.c.h.b16 %v1483
        %v1638 = vunpack.c.l.b16 %v1484
        %v1639 = vunpack.c.l.b16 %v1485
        %v1640 = vunpack.c.h.b16 %v1485
        %v1641 = vunpack.c.l.b16 %v1486
        %v1642 = vunpack.c.l.b16 %v1487
        %v1643 = vunpack.c.h.b16 %v1487
        %v1644 = vunpack.c.l.b16 %v1488
        %v1645 = vunpack.c.l.b16 %v1489
        %v1646 = vunpack.c.h.b16 %v1489
        %v1647 = vunpack.c.l.b16 %v1490
        %v1648 = vunpack.c.l.b16 %v1491
        %v1649 = vunpack.c.h.b16 %v1491
        %v1650 = vunpack.c.l.b16 %v1492
        %v1651 = vunpack.c.l.b16 %v1493
        %v1652 = vunpack.c.h.b16 %v1493
        %v1653 = vunpack.c.l.b16 %v1494
        %v1654 = vunpack.c.l.b16 %v1495
        %v1655 = vunpack.c.h.b16 %v1495
        %v1656 = vunpack.c.l.b16 %v1496
        %v1657 = vpack.c.b16 %v1564, %v1561
        %v1658 = vpack.c.b16 %v1565, %v1562
        %v1659 = vpack.c.b16 %v1566, %v1563
        %v1660 = vpack.c.b16 %v1570, %v1567
        %v1661 = vpack.c.b16 %v1571, %v1568
        %v1662 = vpack.c.b16 %v1572, %v1569
        %v1663 = vpack.c.b16 %v1576, %v1573
        %v1664 = vpack.c.b16 %v1577, %v1574
        %v1665 = vpack.c.b16 %v1578, %v1575
        %v1666 = vpack.c.b16 %v1582, %v1579
        %v1667 = vpack.c.b16 %v1583, %v1580
        %v1668 = vpack.c.b16 %v1584, %v1581
        %v1669 = vpack.c.b16 %v1588, %v1585
        %v1670 = vpack.c.b16 %v1589, %v1586
        %v1671 = vpack.c.b16 %v1590, %v1587
        %v1672 = vpack.c.b16 %v1594, %v1591
        %v1673 = vpack.c.b16 %v1595, %v1592
        %v1674 = vpack.c.b16 %v1596, %v1593
        %v1675 = vpack.c.b16 %v1600, %v1597
        %v1676 = vpack.c.b16 %v1601, %v1598
        %v1677 = vpack.c.b16 %v1602, %v1599
        %v1678 = vpack.c.b16 %v1606, %v1603
        %v1679 = vpack.c.b16 %v1607, %v1604
        %v1680 = vpack.c.b16 %v1608, %v1605
        %v1681 = vpack.c.b16 %v1612, %v1609
        %v1682 = vpack.c.b16 %v1613, %v1610
        %v1683 = vpack.c.b16 %v1614, %v1611
        %v1684 = vpack.c.b16 %v1618, %v1615
        %v1685 = vpack.c.b16 %v1619, %v1616
        %v1686 = vpack.c.b16 %v1620, %v1617
        %v1687 = vpack.c.b16 %v1624, %v1621
        %v1688 = vpack.c.b16 %v1625, %v1622
        %v1689 = vpack.c.b16 %v1626, %v1623
        %v1690 = vpack.c.b16 %v1630, %v1627
        %v1691 = vpack.c.b16 %v1631, %v1628
        %v1692 = vpack.c.b16 %v1632, %v1629
        %v1693 = vpack.c.b16 %v1636, %v1633
        %v1694 = vpack.c.b16 %v1637, %v1634
        %v1695 = vpack.c.b16 %v1638, %v1635
        %v1696 = vpack.c.b16 %v1642, %v1639
        %v1697 = vpack.c.b16 %v1643, %v1640
        %v1698 = vpack.c.b16 %v1644, %v1641
        %v1699 = vpack.c.b16 %v1648, %v1645
        %v1700 = vpack.c.b16 %v1649, %v1646
        %v1701 = vpack.c.b16 %v1650, %v1647
        %v1702 = vpack.c.b16 %v1654, %v1651
        %v1703 = vpack.c.b16 %v1655, %v1652
        %v1704 = vpack.c.b16 %v1656, %v1653
        %1753 = vmatprep.subr.bf16.mxu0 %v1658
        %1754 = vmatpush1.bf16.msra.mxu0 %v1657
        %1755 = vmatprep.subr.bf16.mxu0 %v1661
        %1756 = vmatpush1.bf16.msra.mxu0 %v1660
        %1757 = vmatprep.subr.bf16.mxu0 %v1664
        %1758 = vmatpush1.bf16.msra.mxu0 %v1663
        %1759 = vmatprep.subr.bf16.mxu0 %v1667
        %1760 = vmatpush1.bf16.msra.mxu0 %v1666
        %1761 = vmatprep.subr.bf16.mxu0 %v1670
        %1762 = vmatpush1.bf16.msra.mxu0 %v1669
        %1763 = vmatprep.subr.bf16.mxu0 %v1673
        %1764 = vmatpush1.bf16.msra.mxu0 %v1672
        %1765 = vmatprep.subr.bf16.mxu0 %v1676
        %1766 = vmatpush1.bf16.msra.mxu0 %v1675
        %1767 = vmatprep.subr.bf16.mxu0 %v1679
        %1768 = vmatpush1.bf16.msra.mxu0 %v1678
        %1769 = vmatprep.subr.bf16.mxu0 %v1682
        %1770 = vmatpush1.bf16.msra.mxu0 %v1681
        %1771 = vmatprep.subr.bf16.mxu0 %v1685
        %1772 = vmatpush1.bf16.msra.mxu0 %v1684
        %1773 = vmatprep.subr.bf16.mxu0 %v1688
        %1774 = vmatpush1.bf16.msra.mxu0 %v1687
        %1775 = vmatprep.subr.bf16.mxu0 %v1691
        %1776 = vmatpush1.bf16.msra.mxu0 %v1690
        %1777 = vmatprep.subr.bf16.mxu0 %v1694
        %1778 = vmatpush1.bf16.msra.mxu0 %v1693
        %1779 = vmatprep.subr.bf16.mxu0 %v1697
        %1780 = vmatpush1.bf16.msra.mxu0 %v1696
        %1781 = vmatprep.subr.bf16.mxu0 %v1700
        %1782 = vmatpush1.bf16.msra.mxu0 %v1699
        %1783 = vmatprep.subr.bf16.mxu0 %v1703
        %1784 = vmatpush1.bf16.msra.mxu0 %v1702
        %1785 = vmatprep.mubr.bf16.mxu0 %v1430
        %1786 = vmatmul.mubr.bf16.gmra.mrb[0].mxu0 %v1429
        %v1787 = vpop.f32.mrb[0].mxu0
        %v1788 = vadd.f32 0.0, %v1787
        %v1789 = vpop.f32.mrb[0].mxu0
        %v1790 = vadd.f32 0.0, %v1789
        %v1791 = vpop.f32.mrb[0].mxu0
        %v1792 = vadd.f32 0.0, %v1791
        %v1793 = vpop.f32.mrb[0].mxu0
        %v1794 = vadd.f32 0.0, %v1793
        %1795 = vmatprep.mubr.bf16.mxu0 %v1432
        %1796 = vmatmul.mubr.bf16.gmra.mrb[0].mxu0 %v1431
        %v1797 = vpop.f32.mrb[0].mxu0
        %v1798 = vadd.f32 0.0, %v1797
        %v1799 = vpop.f32.mrb[0].mxu0
        %v1800 = vadd.f32 0.0, %v1799
        %v1801 = vpop.f32.mrb[0].mxu0
        %v1802 = vadd.f32 0.0, %v1801
        %v1803 = vpop.f32.mrb[0].mxu0
        %v1804 = vadd.f32 0.0, %v1803
        %1805 = vdwg.mxu0
        %1806 = vmatprep.subr.bf16.mxu0 0
        %1807 = vmatpush1.bf16.msra.mxu0 %v1659
        %1808 = vmatprep.subr.bf16.mxu0 0
        %1809 = vmatpush1.bf16.msra.mxu0 %v1662
        %1810 = vmatprep.subr.bf16.mxu0 0
        %1811 = vmatpush1.bf16.msra.mxu0 %v1665
        %1812 = vmatprep.subr.bf16.mxu0 0
        %1813 = vmatpush1.bf16.msra.mxu0 %v1668
        %1814 = vmatprep.subr.bf16.mxu0 0
        %1815 = vmatpush1.bf16.msra.mxu0 %v1671
        %1816 = vmatprep.subr.bf16.mxu0 0
        %1817 = vmatpush1.bf16.msra.mxu0 %v1674
        %1818 = vmatprep.subr.bf16.mxu0 0
        %1819 = vmatpush1.bf16.msra.mxu0 %v1677
        %1820 = vmatprep.subr.bf16.mxu0 0
        %1821 = vmatpush1.bf16.msra.mxu0 %v1680
        %1822 = vmatprep.subr.bf16.mxu0 0
        %1823 = vmatpush1.bf16.msra.mxu0 %v1683
        %1824 = vmatprep.subr.bf16.mxu0 0
        %1825 = vmatpush1.bf16.msra.mxu0 %v1686
        %1826 = vmatprep.subr.bf16.mxu0 0
        %1827 = vmatpush1.bf16.msra.mxu0 %v1689
        %1828 = vmatprep.subr.bf16.mxu0 0
        %1829 = vmatpush1.bf16.msra.mxu0 %v1692
        %1830 = vmatprep.subr.bf16.mxu0 0
        %1831 = vmatpush1.bf16.msra.mxu0 %v1695
        %1832 = vmatprep.subr.bf16.mxu0 0
        %1833 = vmatpush1.bf16.msra.mxu0 %v1698
        %1834 = vmatprep.subr.bf16.mxu0 0
        %1835 = vmatpush1.bf16.msra.mxu0 %v1701
        %1836 = vmatprep.subr.bf16.mxu0 0
        %1837 = vmatpush1.bf16.msra.mxu0 %v1704
        %1838 = vmatprep.mubr.bf16.mxu0 %v1430
        %1839 = vmatmul.mubr.bf16.gmra.mrb[0].mxu0 %v1429
        %v1840 = vpop.f32.mrb[0].mxu0
        %v1841 = vadd.f32 0.0, %v1840
        %v1842 = vpop.f32.mrb[0].mxu0
        %v1843 = vpop.f32.mrb[0].mxu0
        %v1844 = vadd.f32 0.0, %v1843
        %v1845 = vpop.f32.mrb[0].mxu0
        %1846 = vmatprep.mubr.bf16.mxu0 %v1432
        %1847 = vmatmul.mubr.bf16.gmra.mrb[0].mxu0 %v1431
        %v1848 = vpop.f32.mrb[0].mxu0
        %v1849 = vadd.f32 0.0, %v1848
        %v1850 = vpop.f32.mrb[0].mxu0
        %v1851 = vpop.f32.mrb[0].mxu0
        %v1852 = vadd.f32 0.0, %v1851
        %v1853 = vpop.f32.mrb[0].mxu0
        %1854 = vdwg.mxu0
        %v1855 = vadd.f32 %v916, %v1788
        %v1856 = vadd.f32 %v918, %v1790
        %v1857 = vadd.f32 %v920, %v1792
        %v1858 = vadd.f32 %v922, %v1794
        %v1859 = vadd.f32 %v926, %v1798
        %v1860 = vadd.f32 %v928, %v1800
        %v1861 = vadd.f32 %v930, %v1802
        %v1862 = vadd.f32 %v932, %v1804
        %v1863 = vld [vmem:[%s8] sm:$0x3]
        %v1865 = vlaneseq
        %v1866 = vshrl.u32 %v1865, 7
        %v1867 = vsub.s32 0, %v1866
        %v1868 = vrot.slane %v1863, %v1867
        %v1869 = vlaneseq
        %v1870 = vshrl.u32 %v1869, 7
        %v1871 = vsub.s32 1, %v1870
        %v1872 = vrot.slane %v1863, %v1871
        %v1875 = vadd.f32 %v1855, %v1868
        %v1876 = vadd.f32 %v1856, %v1872
        %v1877 = vadd.f32 %v1857, %v1868
        %v1878 = vadd.f32 %v1858, %v1872
        %v1879 = vadd.f32 %v1859, %v1868
        %v1880 = vadd.f32 %v1860, %v1872
        %v1881 = vadd.f32 %v1861, %v1868
        %v1882 = vadd.f32 %v1862, %v1872
        %v1883 = vmax.f32 %v1875, 0.0
        %v1884 = vmax.f32 %v1876, 0.0
        %v1885 = vmax.f32 %v1877, 0.0
        %v1886 = vmax.f32 %v1878, 0.0
        %v1887 = vmax.f32 %v1879, 0.0
        %v1888 = vmax.f32 %v1880, 0.0
        %v1889 = vmax.f32 %v1881, 0.0
        %v1890 = vmax.f32 %v1882, 0.0
        %v1891 = vadd.f32 %v1883, %v428
        %v1892 = vadd.f32 %v1884, %v429
        %v1893 = vadd.f32 %v1885, %v430
        %v1894 = vadd.f32 %v1886, %v431
        %v1895 = vadd.f32 %v1887, %v432
        %v1896 = vadd.f32 %v1888, %v433
        %v1897 = vadd.f32 %v1889, %v434
        %v1898 = vadd.f32 %v1890, %v435
        %1899 = vst [vmem:[%s406] sm:$0xff] %v1891
        %1900 = vst [vmem:[%s406 + $0x8] sm:$0xff] %v1892
        %1901 = vst [vmem:[%s406 + $0x10] sm:$0xff] %v1893
        %1902 = vst [vmem:[%s406 + $0x18] sm:$0xff] %v1894
        %1903 = vst [vmem:[%s406 + $0x20] sm:$0xff] %v1895
        %1904 = vst [vmem:[%s406 + $0x28] sm:$0xff] %v1896
        %1905 = vst [vmem:[%s406 + $0x30] sm:$0xff] %v1897
        %1906 = vst [vmem:[%s406 + $0x38] sm:$0xff] %v1898
        %v1907 = vadd.f32 %v1071, %v1841
        %v1908 = vadd.f32 %v1074, %v1844
        %v1909 = vadd.f32 %v1079, %v1849
        %v1910 = vadd.f32 %v1082, %v1852
        %v1911 = vld [vmem:[%s9] sm:$0x1]
        %v1913 = vlaneseq
        %v1914 = vshrl.u32 %v1913, 7
        %v1915 = vsub.s32 0, %v1914
        %v1916 = vrot.slane %v1911, %v1915
        %v1918 = vadd.f32 %v1907, %v1916
        %v1919 = vadd.f32 %v1908, %v1916
        %v1920 = vadd.f32 %v1909, %v1916
        %v1921 = vadd.f32 %v1910, %v1916
        %v1922 = vmax.f32 %v1918, 0.0
        %v1923 = vmax.f32 %v1919, 0.0
        %v1924 = vmax.f32 %v1920, 0.0
        %v1925 = vmax.f32 %v1921, 0.0
        %1926 = vst.msk [vmem:[%s424] sm:$0xff] %vm976, %v1922
        %1927 = vst.msk [vmem:[%s424 + $0x8] sm:$0xff] %vm976, %v1923
        %1928 = vst.msk [vmem:[%s424 + $0x10] sm:$0xff] %vm976, %v1924
        %1929 = vst.msk [vmem:[%s424 + $0x18] sm:$0xff] %vm976, %v1925
        %s1930 = smul.u32 4, %s26
        %p1931 = scmp.lt.s32.totalorder %s1930, 7
        %s1932 = scalar_select %p1931, %s1930, 7
        %s1933 = smul.addr %s1932, 8
        %s1934 = scalar_lea.vmem %s10, %s1933
        %s1935 = sand.u32 %s280, 1
        %s1936 = scalar_lea.sflag [#allocation3], %s1935
        %s1937 = sand.u32 %s280, 1
        %s1938 = smul.addr %s1937, 64
        %s1939 = scalar_lea.vmem [#allocation2], %s1938
        // Predicated region
        $region61: #{tpu_custom_call.1} parent=59 // pred_check
          %p1940 = pneg %p264
        $region62: #{tpu_custom_call.1} parent=59 // pred_check_branch
          %1942 = sbr.rel (%p1940) target = $region64
        $region63: #{tpu_custom_call.1} parent=59 // pred_region
          %s1943 = smul.u32 4, %s26
        $region64: #{tpu_custom_call.1} parent=59 // pred_fallthru
          _
        // Predicated region
        $region65: #{tpu_custom_call.1} parent=59 // pred_check
          %p1944 = pneg %p290
        $region66: #{tpu_custom_call.1} parent=59 // pred_check_branch
          %1946 = sbr.rel (%p1944) target = $region68
        $region67: #{tpu_custom_call.1} parent=59 // pred_region
          %s1947 = smul.u32 4, %s26
          %s1949 = ssub.s32 1024, 1024
          %1950 = vsyncadd %s1936, %s1949
          %s1951 = smul.addr %s1947, 2
          %s1952 = smul.addr %s1951, 128
          %s1953 = scalar_lea.hbm %s11, %s1952
          %s1954 = sshll.u32 %s1939, 4
          %s1955 = int_to_ptr.vmem [resolvable:$true] %s1954
          %1960 = dma.vmem_to_hbm [thread:$0]  %s1955, 1024, %s1953, %s1936, 256, 256, 16
        $region68: #{tpu_custom_call.1} parent=59 // pred_fallthru
          _
      $region60: #{tpu_custom_call.1} parent=5 // pred_fallthru
        _
      %p1961 = scmp.le.s32.totalorder 2, %s21
      // Predicated region
      $region69: #{tpu_custom_call.1} parent=5 // pred_check
        %p1962 = pneg %p1961
      $region70: #{tpu_custom_call.1} parent=5 // pred_check_branch
        %1964 = sbr.rel (%p1962) target = $region72
      $region71: #{tpu_custom_call.1} parent=5 // pred_region
        %s1965 = ssub.s32 %s21, 2
        // Predicated region
        $region73: #{tpu_custom_call.1} parent=71 // pred_check
          %p1966 = pneg %p270
        $region74: #{tpu_custom_call.1} parent=71 // pred_check_branch
          %1968 = sbr.rel (%p1966) target = $region76
        $region75: #{tpu_custom_call.1} parent=71 // pred_region
          %s1969 = smul.u32 4, %s27
          %p1970 = scmp.lt.s32.totalorder %s1969, 7
          %s1971 = scalar_select %p1970, %s1969, 7
          %s1972 = smul.addr %s1971, 8
          %s1973 = scalar_lea.vmem %s10, %s1972
        $region76: #{tpu_custom_call.1} parent=71 // pred_fallthru
          _
        // Predicated region
        $region77: #{tpu_custom_call.1} parent=71 // pred_check
          %p1974 = pneg %p296
        $region78: #{tpu_custom_call.1} parent=71 // pred_check_branch
          %1976 = sbr.rel (%p1974) target = $region80
        $region79: #{tpu_custom_call.1} parent=71 // pred_region
          %s1977 = sand.u32 %s281, 1
          %s1978 = scalar_lea.sflag [#allocation3], %s1977
          %s1979 = sand.u32 %s281, 1
          %s1980 = smul.addr %s1979, 64
          %s1981 = scalar_lea.vmem [#allocation2], %s1980
          %1982 = dma.done %s1978, 1024
        $region80: #{tpu_custom_call.1} parent=71 // pred_fallthru
          _
      $region72: #{tpu_custom_call.1} parent=5 // pred_fallthru
        _
    $region6: #{tpu_custom_call.1} parent=1 // loop_footer
      %s25 = sadd.s32 1, %s21
    $region7: #{tpu_custom_call.1} parent=1 // loop_footer_branch
      %20 = sbr.rel target = $region3
    $region8: #{tpu_custom_call.1} parent=1 // loop_exit
      _
    %1983 = vsyncpa [#allocation3], 1
    %s1984 = scalar_lea.sflag [#allocation3], 1
    %1985 = vsyncpa %s1984, 1

</llo_original>
